<compile_context>
chip_gen: v6e
topology: v6e:2x2x1
jax: 0.10.0
libtpu: 0.0.40
codegen_flags: <defaults>
</compile_context>

<pallas_src>
import jax
import jax.numpy as jnp
from jax.experimental import pallas as pl
from jax.experimental.pallas import tpu as pltpu

LANE = 128          # lane width of a vreg
_PAD_Y = -1e30      # exp(_PAD_Y) underflows to exactly 0.0 in f32


def _round_up(x, m):
    return ((x + m - 1) // m) * m


def _cox_loss_kernel(tri_ref, lstrict_ref, y_ref, t_ref, out_ref,
                     carry_ref, l1_ref, l2_ref, den_ref):
    step = pl.program_id(0)

    @pl.when(step == 0)
    def _init():
        carry_ref[...] = jnp.zeros_like(carry_ref)
        l1_ref[...] = jnp.zeros_like(l1_ref)
        l2_ref[...] = jnp.zeros_like(l2_ref)
        den_ref[...] = jnp.zeros_like(den_ref)

    y = y_ref[...]                    # (C, 128) f32
    t = t_ref[...]                    # (C, 128) f32
    exp_y = jnp.exp(y)                # padded entries -> exp(-1e30) == 0.0

    # Level 1: inclusive prefix sum within each 128-wide row (MXU).
    row_cumsum = jnp.dot(exp_y, tri_ref[...],
                         preferred_element_type=jnp.float32)       # (C, 128)

    # Level 2: exclusive prefix of the per-row totals across rows of the
    # chunk (strictly-lower-triangular matmul), broadcast over lanes.
    row_tot = jnp.broadcast_to(row_cumsum[:, LANE - 1:LANE],
                               row_cumsum.shape)                    # (C, 128)
    row_off = jnp.dot(lstrict_ref[...], row_tot,
                      preferred_element_type=jnp.float32)           # (C, 128)

    # Global cumulative sum for this chunk (carry = sum of all prior chunks).
    cumsum = row_cumsum + row_off + carry_ref[...]
    log_cumsum = jnp.log(cumsum)

    # Event indicator: t > 0 (torch.gt). Padded positions have t == 0.
    mask = t > 0.0

    l1_ref[...] += jnp.sum(jnp.where(mask, y, 0.0), keepdims=True)
    l2_ref[...] += jnp.sum(jnp.where(mask, log_cumsum, 0.0), keepdims=True)
    den_ref[...] += jnp.sum(mask.astype(jnp.float32), keepdims=True)
    carry_ref[...] += jnp.sum(exp_y, keepdims=True)

    @pl.when(step == pl.num_programs(0) - 1)
    def _finalize():
        # loss = (-sum(y*mask) + sum(log_cumsum*mask)) / sum(mask)
        out_ref[...] = (l2_ref[...] - l1_ref[...]) / den_ref[...]


def deep_cox_loss(y_predict, t, *, chunk_rows=256):
    """Pallas implementation of DeepCox_LossFunc.forward.

    y_predict: any shape (e.g. (B, 1)); t: any shape with the same number of
    elements (e.g. (B,)).  Returns a scalar f32 loss.
    """
    assert chunk_rows % 8 == 0
    y = jnp.asarray(y_predict, jnp.float32).reshape(-1)
    tt = jnp.asarray(t, jnp.float32).reshape(-1)
    assert y.shape == tt.shape, "y_predict and t must have equal element counts"
    n = y.shape[0]

    rows = max(1, -(-n // LANE))
    total_rows = _round_up(rows, chunk_rows)
    num_chunks = total_rows // chunk_rows
    padded = total_rows * LANE

    # Pad: y with a huge negative (exp == 0, mask-multiplies stay finite),
    #      t with 0 (mask / denom unaffected).
    y_pad = jnp.pad(y, (0, padded - n),
                    constant_values=_PAD_Y).reshape(total_rows, LANE)
    t_pad = jnp.pad(tt, (0, padded - n)).reshape(total_rows, LANE)

    # Constant triangular tiles (built once outside the kernel, kept resident
    # in VMEM since their block index never changes).
    lane_idx = jnp.arange(LANE, dtype=jnp.int32)
    tri_inc = (lane_idx[:, None] <= lane_idx[None, :]).astype(jnp.float32)
    row_idx = jnp.arange(chunk_rows, dtype=jnp.int32)
    lstrict = (row_idx[:, None] > row_idx[None, :]).astype(jnp.float32)

    out = pl.pallas_call(
        _cox_loss_kernel,
        out_shape=jax.ShapeDtypeStruct((1, 1), jnp.float32),
        grid_spec=pltpu.PrefetchScalarGridSpec(
            num_scalar_prefetch=0,
            grid=(num_chunks,),
            in_specs=[
                pl.BlockSpec((LANE, LANE), lambda i: (0, 0)),            # tri
                pl.BlockSpec((chunk_rows, chunk_rows), lambda i: (0, 0)),  # lstrict
                pl.BlockSpec((chunk_rows, LANE), lambda i: (i, 0)),      # y
                pl.BlockSpec((chunk_rows, LANE), lambda i: (i, 0)),      # t
            ],
            out_specs=pl.BlockSpec((1, 1), lambda i: (0, 0)),
            scratch_shapes=[pltpu.VMEM((1, 1), jnp.float32)] * 4,
        ),
        compiler_params=pltpu.CompilerParams(
            dimension_semantics=("arbitrary",)),
    )(tri_inc, lstrict, y_pad, t_pad)
    return out[0, 0]


def _reference_loss(y_predict, t):
    """Pure-JAX reference mirroring the PyTorch forward exactly."""
    y = jnp.asarray(y_predict, jnp.float32).reshape(-1)
    tl = jnp.asarray(t, jnp.float32).reshape(-1)
    t_e = (tl > 0).astype(jnp.float32)
    y_exp = jnp.exp(y)
    cum = jnp.cumsum(y_exp)
    log_cum = jnp.log(cum)
    loss1 = -jnp.sum(y * t_e)
    loss2 = jnp.sum(log_cum * t_e)
    return (loss1 + loss2) / jnp.sum(t_e)


if __name__ == "__main__":
    key = jax.random.PRNGKey(0)
    k1, k2, k3, k4 = jax.random.split(key, 4)

    # --- small case: typical Cox-net output (batch, 1) risk scores ---
    batch = 8
    y_predict = jax.random.normal(k1, (batch, 1), dtype=jnp.float32)
    t_raw = jax.random.uniform(k2, (batch,), dtype=jnp.float32)
    t = jnp.where(t_raw > 0.4, t_raw * 10.0, 0.0)

    loss = deep_cox_loss(y_predict, t)
    jax.block_until_ready(loss)
    ref = _reference_loss(y_predict, t)
    assert jnp.allclose(loss, ref, rtol=1e-5, atol=1e-5), (loss, ref)

    # --- multi-chunk case: exercises the cross-chunk carry path ---
    n_big = 40000
    y_big = jax.random.normal(k3, (n_big, 1), dtype=jnp.float32)
    t_big_raw = jax.random.uniform(k4, (n_big,), dtype=jnp.float32)
    t_big = jnp.where(t_big_raw > 0.4, t_big_raw * 10.0, 0.0)

    loss_big = deep_cox_loss(y_big, t_big)
    jax.block_until_ready(loss_big)
    ref_big = _reference_loss(y_big, t_big)
    assert jnp.allclose(loss_big, ref_big, rtol=1e-3, atol=1e-3), (loss_big, ref_big)

    print("KERNEL_OK")
</pallas_src>

<mosaic_0001>
module attributes {stable_mosaic.version = 11 : i64} {
  func.func @_cox_loss_kernel(%arg0: i32, %arg1: memref<128x128xf32, #tpu.memory_space<vmem>>, %arg2: memref<256x256xf32, #tpu.memory_space<vmem>>, %arg3: memref<256x128xf32, #tpu.memory_space<vmem>>, %arg4: memref<256x128xf32, #tpu.memory_space<vmem>>, %arg5: memref<1x1xf32, #tpu.memory_space<vmem>>, %arg6: memref<1x1xf32, #tpu.memory_space<vmem>>, %arg7: memref<1x1xf32, #tpu.memory_space<vmem>>, %arg8: memref<1x1xf32, #tpu.memory_space<vmem>>, %arg9: memref<1x1xf32, #tpu.memory_space<vmem>>) attributes {dimension_semantics = [#tpu.dimension_semantics<arbitrary>], iteration_bounds = array<i64: 1>, scalar_prefetch = 0 : i64, scratch_operands = 4 : i64, tpu.core_type = #tpu.core_type<tc>, window_params = [{pipeline_mode = #tpu.pipeline_mode<synchronous>, transform_indices = @transform_0, window_bounds = array<i64: 128, 128>}, {pipeline_mode = #tpu.pipeline_mode<synchronous>, transform_indices = @transform_1, window_bounds = array<i64: 256, 256>}, {transform_indices = @transform_2, window_bounds = array<i64: 256, 128>}, {transform_indices = @transform_3, window_bounds = array<i64: 256, 128>}, {pipeline_mode = #tpu.pipeline_mode<synchronous>, transform_indices = @transform_4, window_bounds = array<i64: 1, 1>}]} {
    %c0_i32 = arith.constant 0 : i32
    %0 = arith.cmpi eq, %arg0, %c0_i32 : i32
    %1 = arith.extui %0 : i1 to i32
    %c0_i32_0 = arith.constant 0 : i32
    %2 = arith.cmpi ne, %1, %c0_i32_0 : i32
    scf.if %2 {
      %cst_36 = arith.constant 0.000000e+00 : f32
      %61 = vector.broadcast %cst_36 : f32 to vector<1x1xf32>
      %c0_37 = arith.constant 0 : index
      %c0_38 = arith.constant 0 : index
      %62 = vector.load %arg6[%c0_37, %c0_38] : memref<1x1xf32, #tpu.memory_space<vmem>>, vector<1x1xf32>
      tpu.vector_store %arg6[%c0_37, %c0_38], %61 {strides = array<i32>} : memref<1x1xf32, #tpu.memory_space<vmem>>, vector<1x1xf32>,
      %cst_39 = arith.constant 0.000000e+00 : f32
      %63 = vector.broadcast %cst_39 : f32 to vector<1x1xf32>
      %c0_40 = arith.constant 0 : index
      %c0_41 = arith.constant 0 : index
      %64 = vector.load %arg7[%c0_40, %c0_41] : memref<1x1xf32, #tpu.memory_space<vmem>>, vector<1x1xf32>
      tpu.vector_store %arg7[%c0_40, %c0_41], %63 {strides = array<i32>} : memref<1x1xf32, #tpu.memory_space<vmem>>, vector<1x1xf32>,
      %cst_42 = arith.constant 0.000000e+00 : f32
      %65 = vector.broadcast %cst_42 : f32 to vector<1x1xf32>
      %c0_43 = arith.constant 0 : index
      %c0_44 = arith.constant 0 : index
      %66 = vector.load %arg8[%c0_43, %c0_44] : memref<1x1xf32, #tpu.memory_space<vmem>>, vector<1x1xf32>
      tpu.vector_store %arg8[%c0_43, %c0_44], %65 {strides = array<i32>} : memref<1x1xf32, #tpu.memory_space<vmem>>, vector<1x1xf32>,
      %cst_45 = arith.constant 0.000000e+00 : f32
      %67 = vector.broadcast %cst_45 : f32 to vector<1x1xf32>
      %c0_46 = arith.constant 0 : index
      %c0_47 = arith.constant 0 : index
      %68 = vector.load %arg9[%c0_46, %c0_47] : memref<1x1xf32, #tpu.memory_space<vmem>>, vector<1x1xf32>
      tpu.vector_store %arg9[%c0_46, %c0_47], %67 {strides = array<i32>} : memref<1x1xf32, #tpu.memory_space<vmem>>, vector<1x1xf32>,
    } else {
    }
    %c0 = arith.constant 0 : index
    %c0_1 = arith.constant 0 : index
    %3 = vector.load %arg3[%c0, %c0_1] : memref<256x128xf32, #tpu.memory_space<vmem>>, vector<256x128xf32>
    %c0_2 = arith.constant 0 : index
    %c0_3 = arith.constant 0 : index
    %4 = vector.load %arg4[%c0_2, %c0_3] : memref<256x128xf32, #tpu.memory_space<vmem>>, vector<256x128xf32>
    %5 = math.exp %3 : vector<256x128xf32>
    %c0_4 = arith.constant 0 : index
    %c0_5 = arith.constant 0 : index
    %6 = vector.load %arg1[%c0_4, %c0_5] : memref<128x128xf32, #tpu.memory_space<vmem>>, vector<128x128xf32>
    %cst = arith.constant dense<0.000000e+00> : vector<256x128xf32>
    %7 = tpu.matmul %5, %6, %cst {dimension_numbers = #tpu.dot_dimension_numbers<[1], [0], [0], [1], [0, 0, 1, 1], [], []>} : vector<256x128xf32>, vector<128x128xf32>, vector<256x128xf32> -> vector<256x128xf32>
    %8 = vector.extract_strided_slice %7 {offsets = [0, 127], sizes = [256, 1], strides = [1, 1]} : vector<256x128xf32> to vector<256x1xf32>
    %9 = vector.shape_cast %8 : vector<256x1xf32> to vector<256x1xf32>
    %10 = vector.broadcast %9 : vector<256x1xf32> to vector<256x128xf32>
    %c0_6 = arith.constant 0 : index
    %c0_7 = arith.constant 0 : index
    %11 = vector.load %arg2[%c0_6, %c0_7] : memref<256x256xf32, #tpu.memory_space<vmem>>, vector<256x256xf32>
    %cst_8 = arith.constant dense<0.000000e+00> : vector<256x128xf32>
    %12 = tpu.matmul %11, %10, %cst_8 {dimension_numbers = #tpu.dot_dimension_numbers<[1], [0], [0], [1], [0, 0, 1, 1], [], []>} : vector<256x256xf32>, vector<256x128xf32>, vector<256x128xf32> -> vector<256x128xf32>
    %13 = arith.addf %7, %12 : vector<256x128xf32>
    %c0_9 = arith.constant 0 : index
    %c0_10 = arith.constant 0 : index
    %14 = vector.load %arg6[%c0_9, %c0_10] : memref<1x1xf32, #tpu.memory_space<vmem>>, vector<1x1xf32>
    %15 = vector.broadcast %14 : vector<1x1xf32> to vector<256x128xf32>
    %16 = arith.addf %13, %15 : vector<256x128xf32>
    %17 = math.log %16 : vector<256x128xf32>
    %cst_11 = arith.constant 0.000000e+00 : f32
    %18 = vector.broadcast %cst_11 : f32 to vector<256x128xf32>
    %19 = arith.cmpf ogt, %4, %18 : vector<256x128xf32>
    %c0_12 = arith.constant 0 : index
    %c0_13 = arith.constant 0 : index
    %20 = vector.load %arg7[%c0_12, %c0_13] : memref<1x1xf32, #tpu.memory_space<vmem>>, vector<1x1xf32>
    %cst_14 = arith.constant 0.000000e+00 : f32
    %21 = vector.broadcast %cst_14 : f32 to vector<256x128xf32>
    %22 = arith.select %19, %3, %21 : vector<256x128xi1>, vector<256x128xf32>
    %23 = vector.shape_cast %22 : vector<256x128xf32> to vector<1x256x128xf32>
    %cst_15 = arith.constant dense<0.000000e+00> : vector<1xf32>
    %24 = vector.multi_reduction <add>, %23, %cst_15 [1, 2] : vector<1x256x128xf32> to vector<1xf32>
    %25 = vector.shape_cast %24 : vector<1xf32> to vector<1x1x1xf32>
    %26 = vector.extract %25[0, 0, 0] : f32 from vector<1x1x1xf32>
    %27 = vector.broadcast %26 : f32 to vector<1x1xf32>
    %28 = arith.addf %20, %27 : vector<1x1xf32>
    %c0_16 = arith.constant 0 : index
    %c0_17 = arith.constant 0 : index
    %29 = vector.load %arg7[%c0_16, %c0_17] : memref<1x1xf32, #tpu.memory_space<vmem>>, vector<1x1xf32>
    tpu.vector_store %arg7[%c0_16, %c0_17], %28 {strides = array<i32>} : memref<1x1xf32, #tpu.memory_space<vmem>>, vector<1x1xf32>,
    %c0_18 = arith.constant 0 : index
    %c0_19 = arith.constant 0 : index
    %30 = vector.load %arg8[%c0_18, %c0_19] : memref<1x1xf32, #tpu.memory_space<vmem>>, vector<1x1xf32>
    %cst_20 = arith.constant 0.000000e+00 : f32
    %31 = vector.broadcast %cst_20 : f32 to vector<256x128xf32>
    %32 = arith.select %19, %17, %31 : vector<256x128xi1>, vector<256x128xf32>
    %33 = vector.shape_cast %32 : vector<256x128xf32> to vector<1x256x128xf32>
    %cst_21 = arith.constant dense<0.000000e+00> : vector<1xf32>
    %34 = vector.multi_reduction <add>, %33, %cst_21 [1, 2] : vector<1x256x128xf32> to vector<1xf32>
    %35 = vector.shape_cast %34 : vector<1xf32> to vector<1x1x1xf32>
    %36 = vector.extract %35[0, 0, 0] : f32 from vector<1x1x1xf32>
    %37 = vector.broadcast %36 : f32 to vector<1x1xf32>
    %38 = arith.addf %30, %37 : vector<1x1xf32>
    %c0_22 = arith.constant 0 : index
    %c0_23 = arith.constant 0 : index
    %39 = vector.load %arg8[%c0_22, %c0_23] : memref<1x1xf32, #tpu.memory_space<vmem>>, vector<1x1xf32>
    tpu.vector_store %arg8[%c0_22, %c0_23], %38 {strides = array<i32>} : memref<1x1xf32, #tpu.memory_space<vmem>>, vector<1x1xf32>,
    %c0_24 = arith.constant 0 : index
    %c0_25 = arith.constant 0 : index
    %40 = vector.load %arg9[%c0_24, %c0_25] : memref<1x1xf32, #tpu.memory_space<vmem>>, vector<1x1xf32>
    %41 = arith.extui %19 : vector<256x128xi1> to vector<256x128xi32>
    %42 = arith.sitofp %41 : vector<256x128xi32> to vector<256x128xf32>
    %43 = vector.shape_cast %42 : vector<256x128xf32> to vector<1x256x128xf32>
    %cst_26 = arith.constant dense<0.000000e+00> : vector<1xf32>
    %44 = vector.multi_reduction <add>, %43, %cst_26 [1, 2] : vector<1x256x128xf32> to vector<1xf32>
    %45 = vector.shape_cast %44 : vector<1xf32> to vector<1x1x1xf32>
    %46 = vector.extract %45[0, 0, 0] : f32 from vector<1x1x1xf32>
    %47 = vector.broadcast %46 : f32 to vector<1x1xf32>
    %48 = arith.addf %40, %47 : vector<1x1xf32>
    %c0_27 = arith.constant 0 : index
    %c0_28 = arith.constant 0 : index
    %49 = vector.load %arg9[%c0_27, %c0_28] : memref<1x1xf32, #tpu.memory_space<vmem>>, vector<1x1xf32>
    tpu.vector_store %arg9[%c0_27, %c0_28], %48 {strides = array<i32>} : memref<1x1xf32, #tpu.memory_space<vmem>>, vector<1x1xf32>,
    %c0_29 = arith.constant 0 : index
    %c0_30 = arith.constant 0 : index
    %50 = vector.load %arg6[%c0_29, %c0_30] : memref<1x1xf32, #tpu.memory_space<vmem>>, vector<1x1xf32>
    %51 = vector.shape_cast %5 : vector<256x128xf32> to vector<1x256x128xf32>
    %cst_31 = arith.constant dense<0.000000e+00> : vector<1xf32>
    %52 = vector.multi_reduction <add>, %51, %cst_31 [1, 2] : vector<1x256x128xf32> to vector<1xf32>
    %53 = vector.shape_cast %52 : vector<1xf32> to vector<1x1x1xf32>
    %54 = vector.extract %53[0, 0, 0] : f32 from vector<1x1x1xf32>
    %55 = vector.broadcast %54 : f32 to vector<1x1xf32>
    %56 = arith.addf %50, %55 : vector<1x1xf32>
    %c0_32 = arith.constant 0 : index
    %c0_33 = arith.constant 0 : index
    %57 = vector.load %arg6[%c0_32, %c0_33] : memref<1x1xf32, #tpu.memory_space<vmem>>, vector<1x1xf32>
    tpu.vector_store %arg6[%c0_32, %c0_33], %56 {strides = array<i32>} : memref<1x1xf32, #tpu.memory_space<vmem>>, vector<1x1xf32>,
    %c0_i32_34 = arith.constant 0 : i32
    %58 = arith.cmpi eq, %arg0, %c0_i32_34 : i32
    %59 = arith.extui %58 : i1 to i32
    %c0_i32_35 = arith.constant 0 : i32
    %60 = arith.cmpi ne, %59, %c0_i32_35 : i32
    scf.if %60 {
      %c0_36 = arith.constant 0 : index
      %c0_37 = arith.constant 0 : index
      %61 = vector.load %arg8[%c0_36, %c0_37] : memref<1x1xf32, #tpu.memory_space<vmem>>, vector<1x1xf32>
      %c0_38 = arith.constant 0 : index
      %c0_39 = arith.constant 0 : index
      %62 = vector.load %arg7[%c0_38, %c0_39] : memref<1x1xf32, #tpu.memory_space<vmem>>, vector<1x1xf32>
      %63 = arith.subf %61, %62 : vector<1x1xf32>
      %c0_40 = arith.constant 0 : index
      %c0_41 = arith.constant 0 : index
      %64 = vector.load %arg9[%c0_40, %c0_41] : memref<1x1xf32, #tpu.memory_space<vmem>>, vector<1x1xf32>
      %65 = arith.divf %63, %64 : vector<1x1xf32>
      %c0_42 = arith.constant 0 : index
      %c0_43 = arith.constant 0 : index
      %66 = vector.load %arg5[%c0_42, %c0_43] : memref<1x1xf32, #tpu.memory_space<vmem>>, vector<1x1xf32>
      tpu.vector_store %arg5[%c0_42, %c0_43], %65 {strides = array<i32>} : memref<1x1xf32, #tpu.memory_space<vmem>>, vector<1x1xf32>,
    } else {
    }
    return
  }
  func.func @transform_0(%arg0: i32) -> (i32, i32) {
    %c0_i32 = arith.constant 0 : i32
    %c0_i32_0 = arith.constant 0 : i32
    %c0_i32_1 = arith.constant 0 : i32
    return %c0_i32, %c0_i32_0 : i32, i32
  }
  func.func @transform_1(%arg0: i32) -> (i32, i32) {
    %c0_i32 = arith.constant 0 : i32
    %c0_i32_0 = arith.constant 0 : i32
    %c0_i32_1 = arith.constant 0 : i32
    return %c0_i32, %c0_i32_0 : i32, i32
  }
  func.func @transform_2(%arg0: i32) -> (i32, i32) {
    %c0_i32 = arith.constant 0 : i32
    %c0_i32_0 = arith.constant 0 : i32
    return %arg0, %c0_i32 : i32, i32
  }
  func.func @transform_3(%arg0: i32) -> (i32, i32) {
    %c0_i32 = arith.constant 0 : i32
    %c0_i32_0 = arith.constant 0 : i32
    return %arg0, %c0_i32 : i32, i32
  }
  func.func @transform_4(%arg0: i32) -> (i32, i32) {
    %c0_i32 = arith.constant 0 : i32
    %c0_i32_0 = arith.constant 0 : i32
    %c0_i32_1 = arith.constant 0 : i32
    return %c0_i32, %c0_i32_0 : i32, i32
  }
}

</mosaic_0001>

<llo_original>
// kernel: tpu_custom_call.1
$region0: #{tpu_custom_call.1}
  #allocation0 [shape = 'u32[]', space=smem, size = 0x4, offset = 0x4, fixed_abs, tag = 'smem constant byte address 0x4 - core index']
  #allocation1 [shape = 'u32[144,128]{1,0:T(1,128)}', space=vmem, size = 0x12000, scoped, tag = 'internal scratch']
  #allocation2 [shape = 'f32[1,1]{1,0:T(1,128)}', space=vmem, size = 0x200, scoped, tag = 'scratch operand']
  #allocation3 [shape = 'f32[1,1]{1,0:T(1,128)}', space=vmem, size = 0x200, scoped, tag = 'scratch operand']
  #allocation4 [shape = 'f32[1,1]{1,0:T(1,128)}', space=vmem, size = 0x200, scoped, tag = 'scratch operand']
  #allocation5 [shape = 'f32[1,1]{1,0:T(1,128)}', space=vmem, size = 0x200, scoped, tag = 'scratch operand']
  %s0 = inlined_call_operand.hbm [shape: f32[128,128], index: 0, kind: input, shape index: {}]
  %s1 = inlined_call_operand.hbm [shape: f32[256,256], index: 1, kind: input, shape index: {}]
  %s2 = inlined_call_operand.hbm [shape: f32[256,128], index: 2, kind: input, shape index: {}]
  %s3 = inlined_call_operand.hbm [shape: f32[256,128], index: 3, kind: input, shape index: {}]
  %s4 = inlined_call_operand.hbm [shape: f32[1,1], index: 4, kind: output, shape index: {}]
  %s5 = sld [smem:[#allocation0]]
  $region50: #{tpu_custom_call.1} parent=0
    _
  %s7 = ssub.s32 1, %s5
  %s8 = scalar_select 0, %s7, %s5
  $region1: #{tpu_custom_call.1} parent=0
    #allocation6 [shape = 'u8[65536]{0}', space=vmem, size = 0x10000, scoped, tag = 'input window, operand 0, single buffered']
    #allocation7 [shape = 's32[1]{0}', space=sflag, size = 0x4, scoped, tag = 'scoped memory for tpu_custom_call.1']
    #allocation8 [shape = 's32[1]{0}', space=sflag, size = 0x4, scoped, tag = 'scoped memory for tpu_custom_call.1']
    #allocation9 [shape = 'u8[262144]{0}', space=vmem, size = 0x40000, scoped, tag = 'input window, operand 1, single buffered']
    #allocation10 [shape = 's32[1]{0}', space=sflag, size = 0x4, scoped, tag = 'scoped memory for tpu_custom_call.1']
    #allocation11 [shape = 'u8[131072]{0}', space=vmem, size = 0x20000, scoped, tag = 'input window, operand 2, single buffered']
    #allocation12 [shape = 'u8[131072]{0}', space=vmem, size = 0x20000, scoped, tag = 'input window, operand 3, single buffered']
    #allocation13 [shape = 's32[1]{0}', space=sflag, size = 0x4, scoped, tag = 'scoped memory for tpu_custom_call.1']
    #allocation14 [shape = 'u8[512]{0}', space=vmem, size = 0x400, scoped, tag = 'output window, operand 0, single buffered']
    %9 = vsyncpa [#allocation7], 0
    %10 = vsyncpa [#allocation10], 0
    %11 = vsyncpa [#allocation13], 0
    %12 = vsyncpa [#allocation8], 0
    // Predicated region
    $region2: #{tpu_custom_call.1} parent=1 // pred_check
      _
    $region3: #{tpu_custom_call.1} parent=1 // pred_check_branch
      %14 = sbr.rel (0) target = $region5
    $region4: #{tpu_custom_call.1} parent=1 // pred_region
      %s16 = ssub.s32 2048, 2048
      %17 = vsyncadd [#allocation7], %s16
      %s18 = sshll.u32 [#allocation6], 4
      %s19 = int_to_ptr.vmem [resolvable:$true] %s18
      %24 = dma.hbm_to_vmem [thread:$0]  %s0, 2048, %s19, [#allocation7], 128, 128, 8
    $region5: #{tpu_custom_call.1} parent=1 // pred_fallthru
      _
    // Predicated region
    $region6: #{tpu_custom_call.1} parent=1 // pred_check
      _
    $region7: #{tpu_custom_call.1} parent=1 // pred_check_branch
      %26 = sbr.rel (0) target = $region9
    $region8: #{tpu_custom_call.1} parent=1 // pred_region
      %s28 = ssub.s32 8192, 8192
      %29 = vsyncadd [#allocation10], %s28
      %s30 = sshll.u32 [#allocation9], 4
      %s31 = int_to_ptr.vmem [resolvable:$true] %s30
      %36 = dma.hbm_to_vmem [thread:$0]  %s1, 8192, %s31, [#allocation10], 256, 256, 16
    $region9: #{tpu_custom_call.1} parent=1 // pred_fallthru
      _
    // Predicated region
    $region10: #{tpu_custom_call.1} parent=1 // pred_check
      _
    $region11: #{tpu_custom_call.1} parent=1 // pred_check_branch
      %38 = sbr.rel (0) target = $region13
    $region12: #{tpu_custom_call.1} parent=1 // pred_region
      %s40 = ssub.s32 4096, 4096
      %41 = vsyncadd [#allocation10], %s40
      %s42 = sshll.u32 [#allocation11], 4
      %s43 = int_to_ptr.vmem [resolvable:$true] %s42
      %48 = dma.hbm_to_vmem [thread:$0]  %s2, 4096, %s43, [#allocation10], 128, 128, 8
    $region13: #{tpu_custom_call.1} parent=1 // pred_fallthru
      _
    // Predicated region
    $region14: #{tpu_custom_call.1} parent=1 // pred_check
      _
    $region15: #{tpu_custom_call.1} parent=1 // pred_check_branch
      %50 = sbr.rel (0) target = $region17
    $region16: #{tpu_custom_call.1} parent=1 // pred_region
      %s52 = ssub.s32 4096, 4096
      %53 = vsyncadd [#allocation13], %s52
      %s54 = sshll.u32 [#allocation12], 4
      %s55 = int_to_ptr.vmem [resolvable:$true] %s54
      %60 = dma.hbm_to_vmem [thread:$0]  %s3, 4096, %s55, [#allocation13], 128, 128, 8
    $region17: #{tpu_custom_call.1} parent=1 // pred_fallthru
      _
    // Predicated region
    $region18: #{tpu_custom_call.1} parent=1 // pred_check
      _
    $region19: #{tpu_custom_call.1} parent=1 // pred_check_branch
      %62 = sbr.rel (0) target = $region21
    $region20: #{tpu_custom_call.1} parent=1 // pred_region
      %63 = dma.done [#allocation7], 2048
    $region21: #{tpu_custom_call.1} parent=1 // pred_fallthru
      _
    // Predicated region
    $region22: #{tpu_custom_call.1} parent=1 // pred_check
      _
    $region23: #{tpu_custom_call.1} parent=1 // pred_check_branch
      %65 = sbr.rel (0) target = $region25
    $region24: #{tpu_custom_call.1} parent=1 // pred_region
      %66 = dma.done [#allocation10], 8192
    $region25: #{tpu_custom_call.1} parent=1 // pred_fallthru
      _
    // Predicated region
    $region26: #{tpu_custom_call.1} parent=1 // pred_check
      _
    $region27: #{tpu_custom_call.1} parent=1 // pred_check_branch
      %68 = sbr.rel (0) target = $region29
    $region28: #{tpu_custom_call.1} parent=1 // pred_region
      %69 = dma.done [#allocation10], 4096
    $region29: #{tpu_custom_call.1} parent=1 // pred_fallthru
      _
    // Predicated region
    $region30: #{tpu_custom_call.1} parent=1 // pred_check
      _
    $region31: #{tpu_custom_call.1} parent=1 // pred_check_branch
      %71 = sbr.rel (0) target = $region33
    $region32: #{tpu_custom_call.1} parent=1 // pred_region
      %72 = dma.done [#allocation13], 4096
    $region33: #{tpu_custom_call.1} parent=1 // pred_fallthru
      _
    %p73 = scmp.eq.s32.totalorder 0, 0
    // Predicated region
    $region34: #{tpu_custom_call.1} parent=1 // pred_check
      %p74 = pneg %p73
    $region35: #{tpu_custom_call.1} parent=1 // pred_check_branch
      %76 = sbr.rel (%p74) target = $region37
    $region36: #{tpu_custom_call.1} parent=1 // pred_region
      %vm77 = vcmask 0
      %78 = vst.msk [vmem:[#allocation2] sm:$0x1] %vm77, 0.0
      %79 = vst.msk [vmem:[#allocation3] sm:$0x1] %vm77, 0.0
      %80 = vst.msk [vmem:[#allocation4] sm:$0x1] %vm77, 0.0
      %81 = vst.msk [vmem:[#allocation5] sm:$0x1] %vm77, 0.0
    $region37: #{tpu_custom_call.1} parent=1 // pred_fallthru
      _
    %v82 = vld [vmem:[#allocation11] sm:$0xff]
    %v83 = vld [vmem:[#allocation11 + $0x8] sm:$0xff]
    %v84 = vld [vmem:[#allocation11 + $0x10] sm:$0xff]
    %v85 = vld [vmem:[#allocation11 + $0x18] sm:$0xff]
    %v86 = vld [vmem:[#allocation11 + $0x20] sm:$0xff]
    %v87 = vld [vmem:[#allocation11 + $0x28] sm:$0xff]
    %v88 = vld [vmem:[#allocation11 + $0x30] sm:$0xff]
    %v89 = vld [vmem:[#allocation11 + $0x38] sm:$0xff]
    %v90 = vld [vmem:[#allocation11 + $0x40] sm:$0xff]
    %v91 = vld [vmem:[#allocation11 + $0x48] sm:$0xff]
    %v92 = vld [vmem:[#allocation11 + $0x50] sm:$0xff]
    %v93 = vld [vmem:[#allocation11 + $0x58] sm:$0xff]
    %v94 = vld [vmem:[#allocation11 + $0x60] sm:$0xff]
    %v95 = vld [vmem:[#allocation11 + $0x68] sm:$0xff]
    %v96 = vld [vmem:[#allocation11 + $0x70] sm:$0xff]
    %v97 = vld [vmem:[#allocation11 + $0x78] sm:$0xff]
    %v98 = vld [vmem:[#allocation11 + $0x80] sm:$0xff]
    %v99 = vld [vmem:[#allocation11 + $0x88] sm:$0xff]
    %v100 = vld [vmem:[#allocation11 + $0x90] sm:$0xff]
    %v101 = vld [vmem:[#allocation11 + $0x98] sm:$0xff]
    %v102 = vld [vmem:[#allocation11 + $0xa0] sm:$0xff]
    %v103 = vld [vmem:[#allocation11 + $0xa8] sm:$0xff]
    %v104 = vld [vmem:[#allocation11 + $0xb0] sm:$0xff]
    %v105 = vld [vmem:[#allocation11 + $0xb8] sm:$0xff]
    %v106 = vld [vmem:[#allocation11 + $0xc0] sm:$0xff]
    %v107 = vld [vmem:[#allocation11 + $0xc8] sm:$0xff]
    %v108 = vld [vmem:[#allocation11 + $0xd0] sm:$0xff]
    %v109 = vld [vmem:[#allocation11 + $0xd8] sm:$0xff]
    %v110 = vld [vmem:[#allocation11 + $0xe0] sm:$0xff]
    %v111 = vld [vmem:[#allocation11 + $0xe8] sm:$0xff]
    %v112 = vld [vmem:[#allocation11 + $0xf0] sm:$0xff]
    %v113 = vld [vmem:[#allocation11 + $0xf8] sm:$0xff]
    %v114 = vld [vmem:[#allocation12] sm:$0xff]
    %v115 = vld [vmem:[#allocation12 + $0x8] sm:$0xff]
    %v116 = vld [vmem:[#allocation12 + $0x10] sm:$0xff]
    %v117 = vld [vmem:[#allocation12 + $0x18] sm:$0xff]
    %v118 = vld [vmem:[#allocation12 + $0x20] sm:$0xff]
    %v119 = vld [vmem:[#allocation12 + $0x28] sm:$0xff]
    %v120 = vld [vmem:[#allocation12 + $0x30] sm:$0xff]
    %v121 = vld [vmem:[#allocation12 + $0x38] sm:$0xff]
    %v122 = vld [vmem:[#allocation12 + $0x40] sm:$0xff]
    %v123 = vld [vmem:[#allocation12 + $0x48] sm:$0xff]
    %v124 = vld [vmem:[#allocation12 + $0x50] sm:$0xff]
    %v125 = vld [vmem:[#allocation12 + $0x58] sm:$0xff]
    %v126 = vld [vmem:[#allocation12 + $0x60] sm:$0xff]
    %v127 = vld [vmem:[#allocation12 + $0x68] sm:$0xff]
    %v128 = vld [vmem:[#allocation12 + $0x70] sm:$0xff]
    %v129 = vld [vmem:[#allocation12 + $0x78] sm:$0xff]
    %v130 = vld [vmem:[#allocation12 + $0x80] sm:$0xff]
    %v131 = vld [vmem:[#allocation12 + $0x88] sm:$0xff]
    %v132 = vld [vmem:[#allocation12 + $0x90] sm:$0xff]
    %v133 = vld [vmem:[#allocation12 + $0x98] sm:$0xff]
    %v134 = vld [vmem:[#allocation12 + $0xa0] sm:$0xff]
    %v135 = vld [vmem:[#allocation12 + $0xa8] sm:$0xff]
    %v136 = vld [vmem:[#allocation12 + $0xb0] sm:$0xff]
    %v137 = vld [vmem:[#allocation12 + $0xb8] sm:$0xff]
    %v138 = vld [vmem:[#allocation12 + $0xc0] sm:$0xff]
    %v139 = vld [vmem:[#allocation12 + $0xc8] sm:$0xff]
    %v140 = vld [vmem:[#allocation12 + $0xd0] sm:$0xff]
    %v141 = vld [vmem:[#allocation12 + $0xd8] sm:$0xff]
    %v142 = vld [vmem:[#allocation12 + $0xe0] sm:$0xff]
    %v143 = vld [vmem:[#allocation12 + $0xe8] sm:$0xff]
    %v144 = vld [vmem:[#allocation12 + $0xf0] sm:$0xff]
    %v145 = vld [vmem:[#allocation12 + $0xf8] sm:$0xff]
    %v146 = vmul.f32 %v82, 1.442695
    %v147 = vpow.pop %v146
    %v148 = vmul.f32 %v83, 1.442695
    %v149 = vpow.pop %v148
    %v150 = vmul.f32 %v84, 1.442695
    %v151 = vpow.pop %v150
    %v152 = vmul.f32 %v85, 1.442695
    %v153 = vpow.pop %v152
    %v154 = vmul.f32 %v86, 1.442695
    %v155 = vpow.pop %v154
    %v156 = vmul.f32 %v87, 1.442695
    %v157 = vpow.pop %v156
    %v158 = vmul.f32 %v88, 1.442695
    %v159 = vpow.pop %v158
    %v160 = vmul.f32 %v89, 1.442695
    %v161 = vpow.pop %v160
    %v162 = vmul.f32 %v90, 1.442695
    %v163 = vpow.pop %v162
    %v164 = vmul.f32 %v91, 1.442695
    %v165 = vpow.pop %v164
    %v166 = vmul.f32 %v92, 1.442695
    %v167 = vpow.pop %v166
    %v168 = vmul.f32 %v93, 1.442695
    %v169 = vpow.pop %v168
    %v170 = vmul.f32 %v94, 1.442695
    %v171 = vpow.pop %v170
    %v172 = vmul.f32 %v95, 1.442695
    %v173 = vpow.pop %v172
    %v174 = vmul.f32 %v96, 1.442695
    %v175 = vpow.pop %v174
    %v176 = vmul.f32 %v97, 1.442695
    %v177 = vpow.pop %v176
    %v178 = vmul.f32 %v98, 1.442695
    %v179 = vpow.pop %v178
    %v180 = vmul.f32 %v99, 1.442695
    %v181 = vpow.pop %v180
    %v182 = vmul.f32 %v100, 1.442695
    %v183 = vpow.pop %v182
    %v184 = vmul.f32 %v101, 1.442695
    %v185 = vpow.pop %v184
    %v186 = vmul.f32 %v102, 1.442695
    %v187 = vpow.pop %v186
    %v188 = vmul.f32 %v103, 1.442695
    %v189 = vpow.pop %v188
    %v190 = vmul.f32 %v104, 1.442695
    %v191 = vpow.pop %v190
    %v192 = vmul.f32 %v105, 1.442695
    %v193 = vpow.pop %v192
    %v194 = vmul.f32 %v106, 1.442695
    %v195 = vpow.pop %v194
    %v196 = vmul.f32 %v107, 1.442695
    %v197 = vpow.pop %v196
    %v198 = vmul.f32 %v108, 1.442695
    %v199 = vpow.pop %v198
    %v200 = vmul.f32 %v109, 1.442695
    %v201 = vpow.pop %v200
    %v202 = vmul.f32 %v110, 1.442695
    %v203 = vpow.pop %v202
    %v204 = vmul.f32 %v111, 1.442695
    %v205 = vpow.pop %v204
    %v206 = vmul.f32 %v112, 1.442695
    %v207 = vpow.pop %v206
    %v208 = vmul.f32 %v113, 1.442695
    %v209 = vpow.pop %v208
    %v210 = vld [vmem:[#allocation6] sm:$0xff]
    %v211 = vld [vmem:[#allocation6 + $0x8] sm:$0xff]
    %v212 = vld [vmem:[#allocation6 + $0x10] sm:$0xff]
    %v213 = vld [vmem:[#allocation6 + $0x18] sm:$0xff]
    %v214 = vld [vmem:[#allocation6 + $0x20] sm:$0xff]
    %v215 = vld [vmem:[#allocation6 + $0x28] sm:$0xff]
    %v216 = vld [vmem:[#allocation6 + $0x30] sm:$0xff]
    %v217 = vld [vmem:[#allocation6 + $0x38] sm:$0xff]
    %v218 = vld [vmem:[#allocation6 + $0x40] sm:$0xff]
    %v219 = vld [vmem:[#allocation6 + $0x48] sm:$0xff]
    %v220 = vld [vmem:[#allocation6 + $0x50] sm:$0xff]
    %v221 = vld [vmem:[#allocation6 + $0x58] sm:$0xff]
    %v222 = vld [vmem:[#allocation6 + $0x60] sm:$0xff]
    %v223 = vld [vmem:[#allocation6 + $0x68] sm:$0xff]
    %v224 = vld [vmem:[#allocation6 + $0x70] sm:$0xff]
    %v225 = vld [vmem:[#allocation6 + $0x78] sm:$0xff]
    %226 = vmatprep.subr.mxu0 0.0
    %227 = vmatpush1.msra.mxu0 %v225
    %228 = vmatprep.subr.mxu0 0.0
    %229 = vmatpush1.msra.mxu0 %v224
    %230 = vmatprep.subr.mxu0 0.0
    %231 = vmatpush1.msra.mxu0 %v223
    %232 = vmatprep.subr.mxu0 0.0
    %233 = vmatpush1.msra.mxu0 %v222
    %234 = vmatprep.subr.mxu0 0.0
    %235 = vmatpush1.msra.mxu0 %v221
    %236 = vmatprep.subr.mxu0 0.0
    %237 = vmatpush1.msra.mxu0 %v220
    %238 = vmatprep.subr.mxu0 0.0
    %239 = vmatpush1.msra.mxu0 %v219
    %240 = vmatprep.subr.mxu0 0.0
    %241 = vmatpush1.msra.mxu0 %v218
    %242 = vmatprep.subr.mxu0 0.0
    %243 = vmatpush1.msra.mxu0 %v217
    %244 = vmatprep.subr.mxu0 0.0
    %245 = vmatpush1.msra.mxu0 %v216
    %246 = vmatprep.subr.mxu0 0.0
    %247 = vmatpush1.msra.mxu0 %v215
    %248 = vmatprep.subr.mxu0 0.0
    %249 = vmatpush1.msra.mxu0 %v214
    %250 = vmatprep.subr.mxu0 0.0
    %251 = vmatpush1.msra.mxu0 %v213
    %252 = vmatprep.subr.mxu0 0.0
    %253 = vmatpush1.msra.mxu0 %v212
    %254 = vmatprep.subr.mxu0 0.0
    %255 = vmatpush1.msra.mxu0 %v211
    %256 = vmatprep.subr.mxu0 0.0
    %257 = vmatpush1.msra.mxu0 %v210
    %258 = vmatprep.subr.mxu0 0.0
    %259 = vmatpush2.msra.mxu0 0.0
    %260 = vmatprep.subr.mxu0 0.0
    %261 = vmatpush2.msra.mxu0 0.0
    %262 = vmatprep.subr.mxu0 0.0
    %263 = vmatpush2.msra.mxu0 0.0
    %264 = vmatprep.subr.mxu0 0.0
    %265 = vmatpush2.msra.mxu0 0.0
    %266 = vmatprep.subr.mxu0 0.0
    %267 = vmatpush2.msra.mxu0 0.0
    %268 = vmatprep.subr.mxu0 0.0
    %269 = vmatpush2.msra.mxu0 0.0
    %270 = vmatprep.subr.mxu0 0.0
    %271 = vmatpush2.msra.mxu0 0.0
    %272 = vmatprep.subr.mxu0 0.0
    %273 = vmatpush2.msra.mxu0 0.0
    %274 = vmatprep.subr.mxu0 0.0
    %275 = vmatpush2.msra.mxu0 0.0
    %276 = vmatprep.subr.mxu0 0.0
    %277 = vmatpush2.msra.mxu0 0.0
    %278 = vmatprep.subr.mxu0 0.0
    %279 = vmatpush2.msra.mxu0 0.0
    %280 = vmatprep.subr.mxu0 0.0
    %281 = vmatpush2.msra.mxu0 0.0
    %282 = vmatprep.subr.mxu0 0.0
    %283 = vmatpush2.msra.mxu0 0.0
    %284 = vmatprep.subr.mxu0 0.0
    %285 = vmatpush2.msra.mxu0 0.0
    %286 = vmatprep.subr.mxu0 0.0
    %287 = vmatpush2.msra.mxu0 0.0
    %288 = vmatprep.subr.mxu0 0.0
    %289 = vmatpush2.msra.mxu0 0.0
    %290 = vmatprep.mubr.f32.mxu0 0.0
    %291 = vmatmul.mubr.f32.gmra.mxu0 %v147
    %v292 = vpop.f32.mrf.mxu0
    %v293 = vadd.f32 0.0, %v292
    %v294 = vpop.f32.mrf.mxu0
    %295 = vmatprep.mubr.f32.mxu0 0.0
    %296 = vmatmul.mubr.f32.gmra.mxu0 %v149
    %v297 = vpop.f32.mrf.mxu0
    %v298 = vadd.f32 0.0, %v297
    %v299 = vpop.f32.mrf.mxu0
    %300 = vmatprep.mubr.f32.mxu0 0.0
    %301 = vmatmul.mubr.f32.gmra.mxu0 %v151
    %v302 = vpop.f32.mrf.mxu0
    %v303 = vadd.f32 0.0, %v302
    %v304 = vpop.f32.mrf.mxu0
    %305 = vmatprep.mubr.f32.mxu0 0.0
    %306 = vmatmul.mubr.f32.gmra.mxu0 %v153
    %v307 = vpop.f32.mrf.mxu0
    %v308 = vadd.f32 0.0, %v307
    %v309 = vpop.f32.mrf.mxu0
    %310 = vmatprep.mubr.f32.mxu0 0.0
    %311 = vmatmul.mubr.f32.gmra.mxu0 %v155
    %v312 = vpop.f32.mrf.mxu0
    %v313 = vadd.f32 0.0, %v312
    %v314 = vpop.f32.mrf.mxu0
    %315 = vmatprep.mubr.f32.mxu0 0.0
    %316 = vmatmul.mubr.f32.gmra.mxu0 %v157
    %v317 = vpop.f32.mrf.mxu0
    %v318 = vadd.f32 0.0, %v317
    %v319 = vpop.f32.mrf.mxu0
    %320 = vmatprep.mubr.f32.mxu0 0.0
    %321 = vmatmul.mubr.f32.gmra.mxu0 %v159
    %v322 = vpop.f32.mrf.mxu0
    %v323 = vadd.f32 0.0, %v322
    %v324 = vpop.f32.mrf.mxu0
    %325 = vmatprep.mubr.f32.mxu0 0.0
    %326 = vmatmul.mubr.f32.gmra.mxu0 %v161
    %v327 = vpop.f32.mrf.mxu0
    %v328 = vadd.f32 0.0, %v327
    %v329 = vpop.f32.mrf.mxu0
    %330 = vmatprep.mubr.f32.mxu0 0.0
    %331 = vmatmul.mubr.f32.gmra.mxu0 %v163
    %v332 = vpop.f32.mrf.mxu0
    %v333 = vadd.f32 0.0, %v332
    %v334 = vpop.f32.mrf.mxu0
    %335 = vmatprep.mubr.f32.mxu0 0.0
    %336 = vmatmul.mubr.f32.gmra.mxu0 %v165
    %v337 = vpop.f32.mrf.mxu0
    %v338 = vadd.f32 0.0, %v337
    %v339 = vpop.f32.mrf.mxu0
    %340 = vmatprep.mubr.f32.mxu0 0.0
    %341 = vmatmul.mubr.f32.gmra.mxu0 %v167
    %v342 = vpop.f32.mrf.mxu0
    %v343 = vadd.f32 0.0, %v342
    %v344 = vpop.f32.mrf.mxu0
    %345 = vmatprep.mubr.f32.mxu0 0.0
    %346 = vmatmul.mubr.f32.gmra.mxu0 %v169
    %v347 = vpop.f32.mrf.mxu0
    %v348 = vadd.f32 0.0, %v347
    %v349 = vpop.f32.mrf.mxu0
    %350 = vmatprep.mubr.f32.mxu0 0.0
    %351 = vmatmul.mubr.f32.gmra.mxu0 %v171
    %v352 = vpop.f32.mrf.mxu0
    %v353 = vadd.f32 0.0, %v352
    %v354 = vpop.f32.mrf.mxu0
    %355 = vmatprep.mubr.f32.mxu0 0.0
    %356 = vmatmul.mubr.f32.gmra.mxu0 %v173
    %v357 = vpop.f32.mrf.mxu0
    %v358 = vadd.f32 0.0, %v357
    %v359 = vpop.f32.mrf.mxu0
    %360 = vmatprep.mubr.f32.mxu0 0.0
    %361 = vmatmul.mubr.f32.gmra.mxu0 %v175
    %v362 = vpop.f32.mrf.mxu0
    %v363 = vadd.f32 0.0, %v362
    %v364 = vpop.f32.mrf.mxu0
    %365 = vmatprep.mubr.f32.mxu0 0.0
    %366 = vmatmul.mubr.f32.gmra.mxu0 %v177
    %v367 = vpop.f32.mrf.mxu0
    %v368 = vadd.f32 0.0, %v367
    %v369 = vpop.f32.mrf.mxu0
    %370 = vmatprep.mubr.f32.mxu0 0.0
    %371 = vmatmul.mubr.f32.gmra.mxu0 %v179
    %v372 = vpop.f32.mrf.mxu0
    %v373 = vadd.f32 0.0, %v372
    %v374 = vpop.f32.mrf.mxu0
    %375 = vmatprep.mubr.f32.mxu0 0.0
    %376 = vmatmul.mubr.f32.gmra.mxu0 %v181
    %v377 = vpop.f32.mrf.mxu0
    %v378 = vadd.f32 0.0, %v377
    %v379 = vpop.f32.mrf.mxu0
    %380 = vmatprep.mubr.f32.mxu0 0.0
    %381 = vmatmul.mubr.f32.gmra.mxu0 %v183
    %v382 = vpop.f32.mrf.mxu0
    %v383 = vadd.f32 0.0, %v382
    %v384 = vpop.f32.mrf.mxu0
    %385 = vmatprep.mubr.f32.mxu0 0.0
    %386 = vmatmul.mubr.f32.gmra.mxu0 %v185
    %v387 = vpop.f32.mrf.mxu0
    %v388 = vadd.f32 0.0, %v387
    %v389 = vpop.f32.mrf.mxu0
    %390 = vmatprep.mubr.f32.mxu0 0.0
    %391 = vmatmul.mubr.f32.gmra.mxu0 %v187
    %v392 = vpop.f32.mrf.mxu0
    %v393 = vadd.f32 0.0, %v392
    %v394 = vpop.f32.mrf.mxu0
    %395 = vmatprep.mubr.f32.mxu0 0.0
    %396 = vmatmul.mubr.f32.gmra.mxu0 %v189
    %v397 = vpop.f32.mrf.mxu0
    %v398 = vadd.f32 0.0, %v397
    %v399 = vpop.f32.mrf.mxu0
    %400 = vmatprep.mubr.f32.mxu0 0.0
    %401 = vmatmul.mubr.f32.gmra.mxu0 %v191
    %v402 = vpop.f32.mrf.mxu0
    %v403 = vadd.f32 0.0, %v402
    %v404 = vpop.f32.mrf.mxu0
    %405 = vmatprep.mubr.f32.mxu0 0.0
    %406 = vmatmul.mubr.f32.gmra.mxu0 %v193
    %v407 = vpop.f32.mrf.mxu0
    %v408 = vadd.f32 0.0, %v407
    %v409 = vpop.f32.mrf.mxu0
    %410 = vmatprep.mubr.f32.mxu0 0.0
    %411 = vmatmul.mubr.f32.gmra.mxu0 %v195
    %v412 = vpop.f32.mrf.mxu0
    %v413 = vadd.f32 0.0, %v412
    %v414 = vpop.f32.mrf.mxu0
    %415 = vmatprep.mubr.f32.mxu0 0.0
    %416 = vmatmul.mubr.f32.gmra.mxu0 %v197
    %v417 = vpop.f32.mrf.mxu0
    %v418 = vadd.f32 0.0, %v417
    %v419 = vpop.f32.mrf.mxu0
    %420 = vmatprep.mubr.f32.mxu0 0.0
    %421 = vmatmul.mubr.f32.gmra.mxu0 %v199
    %v422 = vpop.f32.mrf.mxu0
    %v423 = vadd.f32 0.0, %v422
    %v424 = vpop.f32.mrf.mxu0
    %425 = vmatprep.mubr.f32.mxu0 0.0
    %426 = vmatmul.mubr.f32.gmra.mxu0 %v201
    %v427 = vpop.f32.mrf.mxu0
    %v428 = vadd.f32 0.0, %v427
    %v429 = vpop.f32.mrf.mxu0
    %430 = vmatprep.mubr.f32.mxu0 0.0
    %431 = vmatmul.mubr.f32.gmra.mxu0 %v203
    %v432 = vpop.f32.mrf.mxu0
    %v433 = vadd.f32 0.0, %v432
    %v434 = vpop.f32.mrf.mxu0
    %435 = vmatprep.mubr.f32.mxu0 0.0
    %436 = vmatmul.mubr.f32.gmra.mxu0 %v205
    %v437 = vpop.f32.mrf.mxu0
    %v438 = vadd.f32 0.0, %v437
    %v439 = vpop.f32.mrf.mxu0
    %440 = vmatprep.mubr.f32.mxu0 0.0
    %441 = vmatmul.mubr.f32.gmra.mxu0 %v207
    %v442 = vpop.f32.mrf.mxu0
    %v443 = vadd.f32 0.0, %v442
    %v444 = vpop.f32.mrf.mxu0
    %445 = vmatprep.mubr.f32.mxu0 0.0
    %446 = vmatmul.mubr.f32.gmra.mxu0 %v209
    %v447 = vpop.f32.mrf.mxu0
    %v448 = vadd.f32 0.0, %v447
    %v449 = vpop.f32.mrf.mxu0
    %450 = vdwg.mxu0
    %452 = vset.pattern.permute.xlu0 127
    %453 = vperm.xlu0 %452, %v293
    %v454 = vpop.permute.xlu0 %453
    %457 = vset.pattern.permute.xlu0 127
    %458 = vperm.xlu0 %457, %v298
    %v459 = vpop.permute.xlu0 %458
    %462 = vset.pattern.permute.xlu0 127
    %463 = vperm.xlu0 %462, %v303
    %v464 = vpop.permute.xlu0 %463
    %467 = vset.pattern.permute.xlu0 127
    %468 = vperm.xlu0 %467, %v308
    %v469 = vpop.permute.xlu0 %468
    %472 = vset.pattern.permute.xlu0 127
    %473 = vperm.xlu0 %472, %v313
    %v474 = vpop.permute.xlu0 %473
    %477 = vset.pattern.permute.xlu0 127
    %478 = vperm.xlu0 %477, %v318
    %v479 = vpop.permute.xlu0 %478
    %482 = vset.pattern.permute.xlu0 127
    %483 = vperm.xlu0 %482, %v323
    %v484 = vpop.permute.xlu0 %483
    %487 = vset.pattern.permute.xlu0 127
    %488 = vperm.xlu0 %487, %v328
    %v489 = vpop.permute.xlu0 %488
    %492 = vset.pattern.permute.xlu0 127
    %493 = vperm.xlu0 %492, %v333
    %v494 = vpop.permute.xlu0 %493
    %497 = vset.pattern.permute.xlu0 127
    %498 = vperm.xlu0 %497, %v338
    %v499 = vpop.permute.xlu0 %498
    %502 = vset.pattern.permute.xlu0 127
    %503 = vperm.xlu0 %502, %v343
    %v504 = vpop.permute.xlu0 %503
    %507 = vset.pattern.permute.xlu0 127
    %508 = vperm.xlu0 %507, %v348
    %v509 = vpop.permute.xlu0 %508
    %512 = vset.pattern.permute.xlu0 127
    %513 = vperm.xlu0 %512, %v353
    %v514 = vpop.permute.xlu0 %513
    %517 = vset.pattern.permute.xlu0 127
    %518 = vperm.xlu0 %517, %v358
    %v519 = vpop.permute.xlu0 %518
    %522 = vset.pattern.permute.xlu0 127
    %523 = vperm.xlu0 %522, %v363
    %v524 = vpop.permute.xlu0 %523
    %527 = vset.pattern.permute.xlu0 127
    %528 = vperm.xlu0 %527, %v368
    %v529 = vpop.permute.xlu0 %528
    %532 = vset.pattern.permute.xlu0 127
    %533 = vperm.xlu0 %532, %v373
    %v534 = vpop.permute.xlu0 %533
    %537 = vset.pattern.permute.xlu0 127
    %538 = vperm.xlu0 %537, %v378
    %v539 = vpop.permute.xlu0 %538
    %542 = vset.pattern.permute.xlu0 127
    %543 = vperm.xlu0 %542, %v383
    %v544 = vpop.permute.xlu0 %543
    %547 = vset.pattern.permute.xlu0 127
    %548 = vperm.xlu0 %547, %v388
    %v549 = vpop.permute.xlu0 %548
    %552 = vset.pattern.permute.xlu0 127
    %553 = vperm.xlu0 %552, %v393
    %v554 = vpop.permute.xlu0 %553
    %557 = vset.pattern.permute.xlu0 127
    %558 = vperm.xlu0 %557, %v398
    %v559 = vpop.permute.xlu0 %558
    %562 = vset.pattern.permute.xlu0 127
    %563 = vperm.xlu0 %562, %v403
    %v564 = vpop.permute.xlu0 %563
    %567 = vset.pattern.permute.xlu0 127
    %568 = vperm.xlu0 %567, %v408
    %v569 = vpop.permute.xlu0 %568
    %572 = vset.pattern.permute.xlu0 127
    %573 = vperm.xlu0 %572, %v413
    %v574 = vpop.permute.xlu0 %573
    %577 = vset.pattern.permute.xlu0 127
    %578 = vperm.xlu0 %577, %v418
    %v579 = vpop.permute.xlu0 %578
    %582 = vset.pattern.permute.xlu0 127
    %583 = vperm.xlu0 %582, %v423
    %v584 = vpop.permute.xlu0 %583
    %587 = vset.pattern.permute.xlu0 127
    %588 = vperm.xlu0 %587, %v428
    %v589 = vpop.permute.xlu0 %588
    %592 = vset.pattern.permute.xlu0 127
    %593 = vperm.xlu0 %592, %v433
    %v594 = vpop.permute.xlu0 %593
    %597 = vset.pattern.permute.xlu0 127
    %598 = vperm.xlu0 %597, %v438
    %v599 = vpop.permute.xlu0 %598
    %602 = vset.pattern.permute.xlu0 127
    %603 = vperm.xlu0 %602, %v443
    %v604 = vpop.permute.xlu0 %603
    %607 = vset.pattern.permute.xlu0 127
    %608 = vperm.xlu0 %607, %v448
    %v609 = vpop.permute.xlu0 %608
    %v611 = vld [vmem:[#allocation9] sm:$0xff]
    %v612 = vld [vmem:[#allocation9 + $0x8] sm:$0xff]
    %v613 = vld [vmem:[#allocation9 + $0x10] sm:$0xff]
    %v614 = vld [vmem:[#allocation9 + $0x18] sm:$0xff]
    %v615 = vld [vmem:[#allocation9 + $0x20] sm:$0xff]
    %v616 = vld [vmem:[#allocation9 + $0x28] sm:$0xff]
    %v617 = vld [vmem:[#allocation9 + $0x30] sm:$0xff]
    %v618 = vld [vmem:[#allocation9 + $0x38] sm:$0xff]
    %v619 = vld [vmem:[#allocation9 + $0x40] sm:$0xff]
    %v620 = vld [vmem:[#allocation9 + $0x48] sm:$0xff]
    %v621 = vld [vmem:[#allocation9 + $0x50] sm:$0xff]
    %v622 = vld [vmem:[#allocation9 + $0x58] sm:$0xff]
    %v623 = vld [vmem:[#allocation9 + $0x60] sm:$0xff]
    %v624 = vld [vmem:[#allocation9 + $0x68] sm:$0xff]
    %v625 = vld [vmem:[#allocation9 + $0x70] sm:$0xff]
    %v626 = vld [vmem:[#allocation9 + $0x78] sm:$0xff]
    %v627 = vld [vmem:[#allocation9 + $0x80] sm:$0xff]
    %v628 = vld [vmem:[#allocation9 + $0x88] sm:$0xff]
    %v629 = vld [vmem:[#allocation9 + $0x90] sm:$0xff]
    %v630 = vld [vmem:[#allocation9 + $0x98] sm:$0xff]
    %v631 = vld [vmem:[#allocation9 + $0xa0] sm:$0xff]
    %v632 = vld [vmem:[#allocation9 + $0xa8] sm:$0xff]
    %v633 = vld [vmem:[#allocation9 + $0xb0] sm:$0xff]
    %v634 = vld [vmem:[#allocation9 + $0xb8] sm:$0xff]
    %v635 = vld [vmem:[#allocation9 + $0xc0] sm:$0xff]
    %v636 = vld [vmem:[#allocation9 + $0xc8] sm:$0xff]
    %v637 = vld [vmem:[#allocation9 + $0xd0] sm:$0xff]
    %v638 = vld [vmem:[#allocation9 + $0xd8] sm:$0xff]
    %v639 = vld [vmem:[#allocation9 + $0xe0] sm:$0xff]
    %v640 = vld [vmem:[#allocation9 + $0xe8] sm:$0xff]
    %v641 = vld [vmem:[#allocation9 + $0xf0] sm:$0xff]
    %v642 = vld [vmem:[#allocation9 + $0xf8] sm:$0xff]
    %v643 = vld [vmem:[#allocation9 + $0x100] sm:$0xff]
    %v644 = vld [vmem:[#allocation9 + $0x108] sm:$0xff]
    %v645 = vld [vmem:[#allocation9 + $0x110] sm:$0xff]
    %v646 = vld [vmem:[#allocation9 + $0x118] sm:$0xff]
    %v647 = vld [vmem:[#allocation9 + $0x120] sm:$0xff]
    %v648 = vld [vmem:[#allocation9 + $0x128] sm:$0xff]
    %v649 = vld [vmem:[#allocation9 + $0x130] sm:$0xff]
    %v650 = vld [vmem:[#allocation9 + $0x138] sm:$0xff]
    %v651 = vld [vmem:[#allocation9 + $0x140] sm:$0xff]
    %v652 = vld [vmem:[#allocation9 + $0x148] sm:$0xff]
    %v653 = vld [vmem:[#allocation9 + $0x150] sm:$0xff]
    %v654 = vld [vmem:[#allocation9 + $0x158] sm:$0xff]
    %v655 = vld [vmem:[#allocation9 + $0x160] sm:$0xff]
    %v656 = vld [vmem:[#allocation9 + $0x168] sm:$0xff]
    %v657 = vld [vmem:[#allocation9 + $0x170] sm:$0xff]
    %v658 = vld [vmem:[#allocation9 + $0x178] sm:$0xff]
    %v659 = vld [vmem:[#allocation9 + $0x180] sm:$0xff]
    %v660 = vld [vmem:[#allocation9 + $0x188] sm:$0xff]
    %v661 = vld [vmem:[#allocation9 + $0x190] sm:$0xff]
    %v662 = vld [vmem:[#allocation9 + $0x198] sm:$0xff]
    %v663 = vld [vmem:[#allocation9 + $0x1a0] sm:$0xff]
    %v664 = vld [vmem:[#allocation9 + $0x1a8] sm:$0xff]
    %v665 = vld [vmem:[#allocation9 + $0x1b0] sm:$0xff]
    %v666 = vld [vmem:[#allocation9 + $0x1b8] sm:$0xff]
    %v667 = vld [vmem:[#allocation9 + $0x1c0] sm:$0xff]
    %v668 = vld [vmem:[#allocation9 + $0x1c8] sm:$0xff]
    %v669 = vld [vmem:[#allocation9 + $0x1d0] sm:$0xff]
    %v670 = vld [vmem:[#allocation9 + $0x1d8] sm:$0xff]
    %v671 = vld [vmem:[#allocation9 + $0x1e0] sm:$0xff]
    %v672 = vld [vmem:[#allocation9 + $0x1e8] sm:$0xff]
    %v673 = vld [vmem:[#allocation9 + $0x1f0] sm:$0xff]
    %v674 = vld [vmem:[#allocation9 + $0x1f8] sm:$0xff]
    %675 = vmatprep.subr.mxu0 0.0
    %676 = vmatpush1.msra.mxu0 %v529
    %677 = vmatprep.subr.mxu0 0.0
    %678 = vmatpush1.msra.mxu0 %v524
    %679 = vmatprep.subr.mxu0 0.0
    %680 = vmatpush1.msra.mxu0 %v519
    %681 = vmatprep.subr.mxu0 0.0
    %682 = vmatpush1.msra.mxu0 %v514
    %683 = vmatprep.subr.mxu0 0.0
    %684 = vmatpush1.msra.mxu0 %v509
    %685 = vmatprep.subr.mxu0 0.0
    %686 = vmatpush1.msra.mxu0 %v504
    %687 = vmatprep.subr.mxu0 0.0
    %688 = vmatpush1.msra.mxu0 %v499
    %689 = vmatprep.subr.mxu0 0.0
    %690 = vmatpush1.msra.mxu0 %v494
    %691 = vmatprep.subr.mxu0 0.0
    %692 = vmatpush1.msra.mxu0 %v489
    %693 = vmatprep.subr.mxu0 0.0
    %694 = vmatpush1.msra.mxu0 %v484
    %695 = vmatprep.subr.mxu0 0.0
    %696 = vmatpush1.msra.mxu0 %v479
    %697 = vmatprep.subr.mxu0 0.0
    %698 = vmatpush1.msra.mxu0 %v474
    %699 = vmatprep.subr.mxu0 0.0
    %700 = vmatpush1.msra.mxu0 %v469
    %701 = vmatprep.subr.mxu0 0.0
    %702 = vmatpush1.msra.mxu0 %v464
    %703 = vmatprep.subr.mxu0 0.0
    %704 = vmatpush1.msra.mxu0 %v459
    %705 = vmatprep.subr.mxu0 0.0
    %706 = vmatpush1.msra.mxu0 %v454
    %707 = vmatprep.subr.mxu0 0.0
    %708 = vmatpush2.msra.mxu0 %v609
    %709 = vmatprep.subr.mxu0 0.0
    %710 = vmatpush2.msra.mxu0 %v604
    %711 = vmatprep.subr.mxu0 0.0
    %712 = vmatpush2.msra.mxu0 %v599
    %713 = vmatprep.subr.mxu0 0.0
    %714 = vmatpush2.msra.mxu0 %v594
    %715 = vmatprep.subr.mxu0 0.0
    %716 = vmatpush2.msra.mxu0 %v589
    %717 = vmatprep.subr.mxu0 0.0
    %718 = vmatpush2.msra.mxu0 %v584
    %719 = vmatprep.subr.mxu0 0.0
    %720 = vmatpush2.msra.mxu0 %v579
    %721 = vmatprep.subr.mxu0 0.0
    %722 = vmatpush2.msra.mxu0 %v574
    %723 = vmatprep.subr.mxu0 0.0
    %724 = vmatpush2.msra.mxu0 %v569
    %725 = vmatprep.subr.mxu0 0.0
    %726 = vmatpush2.msra.mxu0 %v564
    %727 = vmatprep.subr.mxu0 0.0
    %728 = vmatpush2.msra.mxu0 %v559
    %729 = vmatprep.subr.mxu0 0.0
    %730 = vmatpush2.msra.mxu0 %v554
    %731 = vmatprep.subr.mxu0 0.0
    %732 = vmatpush2.msra.mxu0 %v549
    %733 = vmatprep.subr.mxu0 0.0
    %734 = vmatpush2.msra.mxu0 %v544
    %735 = vmatprep.subr.mxu0 0.0
    %736 = vmatpush2.msra.mxu0 %v539
    %737 = vmatprep.subr.mxu0 0.0
    %738 = vmatpush2.msra.mxu0 %v534
    %739 = vmatprep.mubr.f32.mxu0 %v612
    %740 = vmatmul.mubr.f32.gmra.mxu0 %v611
    %v741 = vpop.f32.mrf.mxu0
    %v742 = vadd.f32 0.0, %v741
    %v743 = vpop.f32.mrf.mxu0
    %744 = vmatprep.mubr.f32.mxu0 %v614
    %745 = vmatmul.mubr.f32.gmra.mxu0 %v613
    %v746 = vpop.f32.mrf.mxu0
    %v747 = vadd.f32 0.0, %v746
    %v748 = vpop.f32.mrf.mxu0
    %749 = vmatprep.mubr.f32.mxu0 %v616
    %750 = vmatmul.mubr.f32.gmra.mxu0 %v615
    %v751 = vpop.f32.mrf.mxu0
    %v752 = vadd.f32 0.0, %v751
    %v753 = vpop.f32.mrf.mxu0
    %754 = vmatprep.mubr.f32.mxu0 %v618
    %755 = vmatmul.mubr.f32.gmra.mxu0 %v617
    %v756 = vpop.f32.mrf.mxu0
    %v757 = vadd.f32 0.0, %v756
    %v758 = vpop.f32.mrf.mxu0
    %759 = vmatprep.mubr.f32.mxu0 %v620
    %760 = vmatmul.mubr.f32.gmra.mxu0 %v619
    %v761 = vpop.f32.mrf.mxu0
    %v762 = vadd.f32 0.0, %v761
    %v763 = vpop.f32.mrf.mxu0
    %764 = vmatprep.mubr.f32.mxu0 %v622
    %765 = vmatmul.mubr.f32.gmra.mxu0 %v621
    %v766 = vpop.f32.mrf.mxu0
    %v767 = vadd.f32 0.0, %v766
    %v768 = vpop.f32.mrf.mxu0
    %769 = vmatprep.mubr.f32.mxu0 %v624
    %770 = vmatmul.mubr.f32.gmra.mxu0 %v623
    %v771 = vpop.f32.mrf.mxu0
    %v772 = vadd.f32 0.0, %v771
    %v773 = vpop.f32.mrf.mxu0
    %774 = vmatprep.mubr.f32.mxu0 %v626
    %775 = vmatmul.mubr.f32.gmra.mxu0 %v625
    %v776 = vpop.f32.mrf.mxu0
    %v777 = vadd.f32 0.0, %v776
    %v778 = vpop.f32.mrf.mxu0
    %779 = vmatprep.mubr.f32.mxu0 %v628
    %780 = vmatmul.mubr.f32.gmra.mxu0 %v627
    %v781 = vpop.f32.mrf.mxu0
    %v782 = vadd.f32 0.0, %v781
    %v783 = vpop.f32.mrf.mxu0
    %784 = vmatprep.mubr.f32.mxu0 %v630
    %785 = vmatmul.mubr.f32.gmra.mxu0 %v629
    %v786 = vpop.f32.mrf.mxu0
    %v787 = vadd.f32 0.0, %v786
    %v788 = vpop.f32.mrf.mxu0
    %789 = vmatprep.mubr.f32.mxu0 %v632
    %790 = vmatmul.mubr.f32.gmra.mxu0 %v631
    %v791 = vpop.f32.mrf.mxu0
    %v792 = vadd.f32 0.0, %v791
    %v793 = vpop.f32.mrf.mxu0
    %794 = vmatprep.mubr.f32.mxu0 %v634
    %795 = vmatmul.mubr.f32.gmra.mxu0 %v633
    %v796 = vpop.f32.mrf.mxu0
    %v797 = vadd.f32 0.0, %v796
    %v798 = vpop.f32.mrf.mxu0
    %799 = vmatprep.mubr.f32.mxu0 %v636
    %800 = vmatmul.mubr.f32.gmra.mxu0 %v635
    %v801 = vpop.f32.mrf.mxu0
    %v802 = vadd.f32 0.0, %v801
    %v803 = vpop.f32.mrf.mxu0
    %804 = vmatprep.mubr.f32.mxu0 %v638
    %805 = vmatmul.mubr.f32.gmra.mxu0 %v637
    %v806 = vpop.f32.mrf.mxu0
    %v807 = vadd.f32 0.0, %v806
    %v808 = vpop.f32.mrf.mxu0
    %809 = vmatprep.mubr.f32.mxu0 %v640
    %810 = vmatmul.mubr.f32.gmra.mxu0 %v639
    %v811 = vpop.f32.mrf.mxu0
    %v812 = vadd.f32 0.0, %v811
    %v813 = vpop.f32.mrf.mxu0
    %814 = vmatprep.mubr.f32.mxu0 %v642
    %815 = vmatmul.mubr.f32.gmra.mxu0 %v641
    %v816 = vpop.f32.mrf.mxu0
    %v817 = vadd.f32 0.0, %v816
    %v818 = vpop.f32.mrf.mxu0
    %819 = vmatprep.mubr.f32.mxu0 %v644
    %820 = vmatmul.mubr.f32.gmra.mxu0 %v643
    %v821 = vpop.f32.mrf.mxu0
    %v822 = vadd.f32 0.0, %v821
    %v823 = vpop.f32.mrf.mxu0
    %824 = vmatprep.mubr.f32.mxu0 %v646
    %825 = vmatmul.mubr.f32.gmra.mxu0 %v645
    %v826 = vpop.f32.mrf.mxu0
    %v827 = vadd.f32 0.0, %v826
    %v828 = vpop.f32.mrf.mxu0
    %829 = vmatprep.mubr.f32.mxu0 %v648
    %830 = vmatmul.mubr.f32.gmra.mxu0 %v647
    %v831 = vpop.f32.mrf.mxu0
    %v832 = vadd.f32 0.0, %v831
    %v833 = vpop.f32.mrf.mxu0
    %834 = vmatprep.mubr.f32.mxu0 %v650
    %835 = vmatmul.mubr.f32.gmra.mxu0 %v649
    %v836 = vpop.f32.mrf.mxu0
    %v837 = vadd.f32 0.0, %v836
    %v838 = vpop.f32.mrf.mxu0
    %839 = vmatprep.mubr.f32.mxu0 %v652
    %840 = vmatmul.mubr.f32.gmra.mxu0 %v651
    %v841 = vpop.f32.mrf.mxu0
    %v842 = vadd.f32 0.0, %v841
    %v843 = vpop.f32.mrf.mxu0
    %844 = vmatprep.mubr.f32.mxu0 %v654
    %845 = vmatmul.mubr.f32.gmra.mxu0 %v653
    %v846 = vpop.f32.mrf.mxu0
    %v847 = vadd.f32 0.0, %v846
    %v848 = vpop.f32.mrf.mxu0
    %849 = vmatprep.mubr.f32.mxu0 %v656
    %850 = vmatmul.mubr.f32.gmra.mxu0 %v655
    %v851 = vpop.f32.mrf.mxu0
    %v852 = vadd.f32 0.0, %v851
    %v853 = vpop.f32.mrf.mxu0
    %854 = vmatprep.mubr.f32.mxu0 %v658
    %855 = vmatmul.mubr.f32.gmra.mxu0 %v657
    %v856 = vpop.f32.mrf.mxu0
    %v857 = vadd.f32 0.0, %v856
    %v858 = vpop.f32.mrf.mxu0
    %859 = vmatprep.mubr.f32.mxu0 %v660
    %860 = vmatmul.mubr.f32.gmra.mxu0 %v659
    %v861 = vpop.f32.mrf.mxu0
    %v862 = vadd.f32 0.0, %v861
    %v863 = vpop.f32.mrf.mxu0
    %864 = vmatprep.mubr.f32.mxu0 %v662
    %865 = vmatmul.mubr.f32.gmra.mxu0 %v661
    %v866 = vpop.f32.mrf.mxu0
    %v867 = vadd.f32 0.0, %v866
    %v868 = vpop.f32.mrf.mxu0
    %869 = vmatprep.mubr.f32.mxu0 %v664
    %870 = vmatmul.mubr.f32.gmra.mxu0 %v663
    %v871 = vpop.f32.mrf.mxu0
    %v872 = vadd.f32 0.0, %v871
    %v873 = vpop.f32.mrf.mxu0
    %874 = vmatprep.mubr.f32.mxu0 %v666
    %875 = vmatmul.mubr.f32.gmra.mxu0 %v665
    %v876 = vpop.f32.mrf.mxu0
    %v877 = vadd.f32 0.0, %v876
    %v878 = vpop.f32.mrf.mxu0
    %879 = vmatprep.mubr.f32.mxu0 %v668
    %880 = vmatmul.mubr.f32.gmra.mxu0 %v667
    %v881 = vpop.f32.mrf.mxu0
    %v882 = vadd.f32 0.0, %v881
    %v883 = vpop.f32.mrf.mxu0
    %884 = vmatprep.mubr.f32.mxu0 %v670
    %885 = vmatmul.mubr.f32.gmra.mxu0 %v669
    %v886 = vpop.f32.mrf.mxu0
    %v887 = vadd.f32 0.0, %v886
    %v888 = vpop.f32.mrf.mxu0
    %889 = vmatprep.mubr.f32.mxu0 %v672
    %890 = vmatmul.mubr.f32.gmra.mxu0 %v671
    %v891 = vpop.f32.mrf.mxu0
    %v892 = vadd.f32 0.0, %v891
    %v893 = vpop.f32.mrf.mxu0
    %894 = vmatprep.mubr.f32.mxu0 %v674
    %895 = vmatmul.mubr.f32.gmra.mxu0 %v673
    %v896 = vpop.f32.mrf.mxu0
    %v897 = vadd.f32 0.0, %v896
    %v898 = vpop.f32.mrf.mxu0
    %899 = vdwg.mxu0
    %v900 = vadd.f32 %v293, %v742
    %v901 = vadd.f32 %v298, %v747
    %v902 = vadd.f32 %v303, %v752
    %v903 = vadd.f32 %v308, %v757
    %v904 = vadd.f32 %v313, %v762
    %v905 = vadd.f32 %v318, %v767
    %v906 = vadd.f32 %v323, %v772
    %v907 = vadd.f32 %v328, %v777
    %v908 = vadd.f32 %v333, %v782
    %v909 = vadd.f32 %v338, %v787
    %v910 = vadd.f32 %v343, %v792
    %v911 = vadd.f32 %v348, %v797
    %v912 = vadd.f32 %v353, %v802
    %v913 = vadd.f32 %v358, %v807
    %v914 = vadd.f32 %v363, %v812
    %v915 = vadd.f32 %v368, %v817
    %v916 = vadd.f32 %v373, %v822
    %v917 = vadd.f32 %v378, %v827
    %v918 = vadd.f32 %v383, %v832
    %v919 = vadd.f32 %v388, %v837
    %v920 = vadd.f32 %v393, %v842
    %v921 = vadd.f32 %v398, %v847
    %v922 = vadd.f32 %v403, %v852
    %v923 = vadd.f32 %v408, %v857
    %v924 = vadd.f32 %v413, %v862
    %v925 = vadd.f32 %v418, %v867
    %v926 = vadd.f32 %v423, %v872
    %v927 = vadd.f32 %v428, %v877
    %v928 = vadd.f32 %v433, %v882
    %v929 = vadd.f32 %v438, %v887
    %v930 = vadd.f32 %v443, %v892
    %v931 = vadd.f32 %v448, %v897
    %v932 = vld [vmem:[#allocation2] sm:$0x1]
    %v934 = vlaneseq
    %v935 = vshrl.u32 %v934, 7
    %v936 = vsub.s32 0, %v935
    %v937 = vrot.slane %v932, %v936
    %938 = vset.pattern.permute.xlu0 0
    %939 = vperm.xlu0 %938, %v937
    %v940 = vpop.permute.xlu0 %939
    %v942 = vadd.f32 %v900, %v940
    %v943 = vadd.f32 %v901, %v940
    %v944 = vadd.f32 %v902, %v940
    %v945 = vadd.f32 %v903, %v940
    %v946 = vadd.f32 %v904, %v940
    %v947 = vadd.f32 %v905, %v940
    %v948 = vadd.f32 %v906, %v940
    %v949 = vadd.f32 %v907, %v940
    %v950 = vadd.f32 %v908, %v940
    %v951 = vadd.f32 %v909, %v940
    %v952 = vadd.f32 %v910, %v940
    %v953 = vadd.f32 %v911, %v940
    %v954 = vadd.f32 %v912, %v940
    %v955 = vadd.f32 %v913, %v940
    %v956 = vadd.f32 %v914, %v940
    %v957 = vadd.f32 %v915, %v940
    %v958 = vadd.f32 %v916, %v940
    %v959 = vadd.f32 %v917, %v940
    %v960 = vadd.f32 %v918, %v940
    %v961 = vadd.f32 %v919, %v940
    %v962 = vadd.f32 %v920, %v940
    %v963 = vadd.f32 %v921, %v940
    %v964 = vadd.f32 %v922, %v940
    %v965 = vadd.f32 %v923, %v940
    %v966 = vadd.f32 %v924, %v940
    %v967 = vadd.f32 %v925, %v940
    %v968 = vadd.f32 %v926, %v940
    %v969 = vadd.f32 %v927, %v940
    %v970 = vadd.f32 %v928, %v940
    %v971 = vadd.f32 %v929, %v940
    %v972 = vadd.f32 %v930, %v940
    %v973 = vadd.f32 %v931, %v940
    %v974 = vlog2.pop %v942
    %v975 = vmul.f32 %v974, 0.6931472
    %v976 = vlog2.pop %v943
    %v977 = vmul.f32 %v976, 0.6931472
    %v978 = vlog2.pop %v944
    %v979 = vmul.f32 %v978, 0.6931472
    %v980 = vlog2.pop %v945
    %v981 = vmul.f32 %v980, 0.6931472
    %v982 = vlog2.pop %v946
    %v983 = vmul.f32 %v982, 0.6931472
    %v984 = vlog2.pop %v947
    %v985 = vmul.f32 %v984, 0.6931472
    %v986 = vlog2.pop %v948
    %v987 = vmul.f32 %v986, 0.6931472
    %v988 = vlog2.pop %v949
    %v989 = vmul.f32 %v988, 0.6931472
    %v990 = vlog2.pop %v950
    %v991 = vmul.f32 %v990, 0.6931472
    %v992 = vlog2.pop %v951
    %v993 = vmul.f32 %v992, 0.6931472
    %v994 = vlog2.pop %v952
    %v995 = vmul.f32 %v994, 0.6931472
    %v996 = vlog2.pop %v953
    %v997 = vmul.f32 %v996, 0.6931472
    %v998 = vlog2.pop %v954
    %v999 = vmul.f32 %v998, 0.6931472
    %v1000 = vlog2.pop %v955
    %v1001 = vmul.f32 %v1000, 0.6931472
    %v1002 = vlog2.pop %v956
    %v1003 = vmul.f32 %v1002, 0.6931472
    %v1004 = vlog2.pop %v957
    %v1005 = vmul.f32 %v1004, 0.6931472
    %v1006 = vlog2.pop %v958
    %v1007 = vmul.f32 %v1006, 0.6931472
    %v1008 = vlog2.pop %v959
    %v1009 = vmul.f32 %v1008, 0.6931472
    %v1010 = vlog2.pop %v960
    %v1011 = vmul.f32 %v1010, 0.6931472
    %v1012 = vlog2.pop %v961
    %v1013 = vmul.f32 %v1012, 0.6931472
    %v1014 = vlog2.pop %v962
    %v1015 = vmul.f32 %v1014, 0.6931472
    %v1016 = vlog2.pop %v963
    %v1017 = vmul.f32 %v1016, 0.6931472
    %v1018 = vlog2.pop %v964
    %v1019 = vmul.f32 %v1018, 0.6931472
    %v1020 = vlog2.pop %v965
    %v1021 = vmul.f32 %v1020, 0.6931472
    %v1022 = vlog2.pop %v966
    %v1023 = vmul.f32 %v1022, 0.6931472
    %v1024 = vlog2.pop %v967
    %v1025 = vmul.f32 %v1024, 0.6931472
    %v1026 = vlog2.pop %v968
    %v1027 = vmul.f32 %v1026, 0.6931472
    %v1028 = vlog2.pop %v969
    %v1029 = vmul.f32 %v1028, 0.6931472
    %v1030 = vlog2.pop %v970
    %v1031 = vmul.f32 %v1030, 0.6931472
    %v1032 = vlog2.pop %v971
    %v1033 = vmul.f32 %v1032, 0.6931472
    %v1034 = vlog2.pop %v972
    %v1035 = vmul.f32 %v1034, 0.6931472
    %v1036 = vlog2.pop %v973
    %v1037 = vmul.f32 %v1036, 0.6931472
    %vm1038 = vcmp.gt.f32.partialorder %v114, 0.0
    %vm1039 = vcmp.gt.f32.partialorder %v115, 0.0
    %vm1040 = vcmp.gt.f32.partialorder %v116, 0.0
    %vm1041 = vcmp.gt.f32.partialorder %v117, 0.0
    %vm1042 = vcmp.gt.f32.partialorder %v118, 0.0
    %vm1043 = vcmp.gt.f32.partialorder %v119, 0.0
    %vm1044 = vcmp.gt.f32.partialorder %v120, 0.0
    %vm1045 = vcmp.gt.f32.partialorder %v121, 0.0
    %vm1046 = vcmp.gt.f32.partialorder %v122, 0.0
    %vm1047 = vcmp.gt.f32.partialorder %v123, 0.0
    %vm1048 = vcmp.gt.f32.partialorder %v124, 0.0
    %vm1049 = vcmp.gt.f32.partialorder %v125, 0.0
    %vm1050 = vcmp.gt.f32.partialorder %v126, 0.0
    %vm1051 = vcmp.gt.f32.partialorder %v127, 0.0
    %vm1052 = vcmp.gt.f32.partialorder %v128, 0.0
    %vm1053 = vcmp.gt.f32.partialorder %v129, 0.0
    %vm1054 = vcmp.gt.f32.partialorder %v130, 0.0
    %vm1055 = vcmp.gt.f32.partialorder %v131, 0.0
    %vm1056 = vcmp.gt.f32.partialorder %v132, 0.0
    %vm1057 = vcmp.gt.f32.partialorder %v133, 0.0
    %vm1058 = vcmp.gt.f32.partialorder %v134, 0.0
    %vm1059 = vcmp.gt.f32.partialorder %v135, 0.0
    %vm1060 = vcmp.gt.f32.partialorder %v136, 0.0
    %vm1061 = vcmp.gt.f32.partialorder %v137, 0.0
    %vm1062 = vcmp.gt.f32.partialorder %v138, 0.0
    %vm1063 = vcmp.gt.f32.partialorder %v139, 0.0
    %vm1064 = vcmp.gt.f32.partialorder %v140, 0.0
    %vm1065 = vcmp.gt.f32.partialorder %v141, 0.0
    %vm1066 = vcmp.gt.f32.partialorder %v142, 0.0
    %vm1067 = vcmp.gt.f32.partialorder %v143, 0.0
    %vm1068 = vcmp.gt.f32.partialorder %v144, 0.0
    %vm1069 = vcmp.gt.f32.partialorder %v145, 0.0
    %v1070 = vld [vmem:[#allocation3] sm:$0x1]
    %v1071 = vsel %vm1038, %v82, 0.0
    %v1072 = vsel %vm1039, %v83, 0.0
    %v1073 = vsel %vm1040, %v84, 0.0
    %v1074 = vsel %vm1041, %v85, 0.0
    %v1075 = vsel %vm1042, %v86, 0.0
    %v1076 = vsel %vm1043, %v87, 0.0
    %v1077 = vsel %vm1044, %v88, 0.0
    %v1078 = vsel %vm1045, %v89, 0.0
    %v1079 = vsel %vm1046, %v90, 0.0
    %v1080 = vsel %vm1047, %v91, 0.0
    %v1081 = vsel %vm1048, %v92, 0.0
    %v1082 = vsel %vm1049, %v93, 0.0
    %v1083 = vsel %vm1050, %v94, 0.0
    %v1084 = vsel %vm1051, %v95, 0.0
    %v1085 = vsel %vm1052, %v96, 0.0
    %v1086 = vsel %vm1053, %v97, 0.0
    %v1087 = vsel %vm1054, %v98, 0.0
    %v1088 = vsel %vm1055, %v99, 0.0
    %v1089 = vsel %vm1056, %v100, 0.0
    %v1090 = vsel %vm1057, %v101, 0.0
    %v1091 = vsel %vm1058, %v102, 0.0
    %v1092 = vsel %vm1059, %v103, 0.0
    %v1093 = vsel %vm1060, %v104, 0.0
    %v1094 = vsel %vm1061, %v105, 0.0
    %v1095 = vsel %vm1062, %v106, 0.0
    %v1096 = vsel %vm1063, %v107, 0.0
    %v1097 = vsel %vm1064, %v108, 0.0
    %v1098 = vsel %vm1065, %v109, 0.0
    %v1099 = vsel %vm1066, %v110, 0.0
    %v1100 = vsel %vm1067, %v111, 0.0
    %v1101 = vsel %vm1068, %v112, 0.0
    %v1102 = vsel %vm1069, %v113, 0.0
    %v1103 = vadd.f32 %v1071, %v1072
    %v1104 = vadd.f32 %v1103, %v1073
    %v1105 = vadd.f32 %v1104, %v1074
    %v1106 = vadd.f32 %v1105, %v1075
    %v1107 = vadd.f32 %v1106, %v1076
    %v1108 = vadd.f32 %v1107, %v1077
    %v1109 = vadd.f32 %v1108, %v1078
    %v1110 = vadd.f32 %v1109, %v1079
    %v1111 = vadd.f32 %v1110, %v1080
    %v1112 = vadd.f32 %v1111, %v1081
    %v1113 = vadd.f32 %v1112, %v1082
    %v1114 = vadd.f32 %v1113, %v1083
    %v1115 = vadd.f32 %v1114, %v1084
    %v1116 = vadd.f32 %v1115, %v1085
    %v1117 = vadd.f32 %v1116, %v1086
    %v1118 = vadd.f32 %v1117, %v1087
    %v1119 = vadd.f32 %v1118, %v1088
    %v1120 = vadd.f32 %v1119, %v1089
    %v1121 = vadd.f32 %v1120, %v1090
    %v1122 = vadd.f32 %v1121, %v1091
    %v1123 = vadd.f32 %v1122, %v1092
    %v1124 = vadd.f32 %v1123, %v1093
    %v1125 = vadd.f32 %v1124, %v1094
    %v1126 = vadd.f32 %v1125, %v1095
    %v1127 = vadd.f32 %v1126, %v1096
    %v1128 = vadd.f32 %v1127, %v1097
    %v1129 = vadd.f32 %v1128, %v1098
    %v1130 = vadd.f32 %v1129, %v1099
    %v1131 = vadd.f32 %v1130, %v1100
    %v1132 = vadd.f32 %v1131, %v1101
    %v1133 = vadd.f32 %v1132, %v1102
    %1134 = vadd.xlane.f32.xlu0 %v1133
    %v1135 = vpop.xlane.xlu0 %1134
    %v1136 = vrot.slane %v1135, 4
    %v1137 = vadd.f32 %v1135, %v1136
    %v1138 = vrot.slane %v1137, 2
    %v1139 = vadd.f32 %v1137, %v1138
    %v1140 = vrot.slane %v1139, 1
    %v1141 = vadd.f32 %v1139, %v1140
    %s1142 = vtos %v1141
    %v1143 = vstv %s1142
    %v1144 = vadd.f32 %v1070, %v1143
    %vm1145 = vcmask 0
    %1146 = vst.msk [vmem:[#allocation3] sm:$0x1] %vm1145, %v1144
    %v1147 = vld [vmem:[#allocation4] sm:$0x1]
    %v1148 = vsel %vm1038, %v975, 0.0
    %v1149 = vsel %vm1039, %v977, 0.0
    %v1150 = vsel %vm1040, %v979, 0.0
    %v1151 = vsel %vm1041, %v981, 0.0
    %v1152 = vsel %vm1042, %v983, 0.0
    %v1153 = vsel %vm1043, %v985, 0.0
    %v1154 = vsel %vm1044, %v987, 0.0
    %v1155 = vsel %vm1045, %v989, 0.0
    %v1156 = vsel %vm1046, %v991, 0.0
    %v1157 = vsel %vm1047, %v993, 0.0
    %v1158 = vsel %vm1048, %v995, 0.0
    %v1159 = vsel %vm1049, %v997, 0.0
    %v1160 = vsel %vm1050, %v999, 0.0
    %v1161 = vsel %vm1051, %v1001, 0.0
    %v1162 = vsel %vm1052, %v1003, 0.0
    %v1163 = vsel %vm1053, %v1005, 0.0
    %v1164 = vsel %vm1054, %v1007, 0.0
    %v1165 = vsel %vm1055, %v1009, 0.0
    %v1166 = vsel %vm1056, %v1011, 0.0
    %v1167 = vsel %vm1057, %v1013, 0.0
    %v1168 = vsel %vm1058, %v1015, 0.0
    %v1169 = vsel %vm1059, %v1017, 0.0
    %v1170 = vsel %vm1060, %v1019, 0.0
    %v1171 = vsel %vm1061, %v1021, 0.0
    %v1172 = vsel %vm1062, %v1023, 0.0
    %v1173 = vsel %vm1063, %v1025, 0.0
    %v1174 = vsel %vm1064, %v1027, 0.0
    %v1175 = vsel %vm1065, %v1029, 0.0
    %v1176 = vsel %vm1066, %v1031, 0.0
    %v1177 = vsel %vm1067, %v1033, 0.0
    %v1178 = vsel %vm1068, %v1035, 0.0
    %v1179 = vsel %vm1069, %v1037, 0.0
    %v1180 = vadd.f32 %v1148, %v1149
    %v1181 = vadd.f32 %v1180, %v1150
    %v1182 = vadd.f32 %v1181, %v1151
    %v1183 = vadd.f32 %v1182, %v1152
    %v1184 = vadd.f32 %v1183, %v1153
    %v1185 = vadd.f32 %v1184, %v1154
    %v1186 = vadd.f32 %v1185, %v1155
    %v1187 = vadd.f32 %v1186, %v1156
    %v1188 = vadd.f32 %v1187, %v1157
    %v1189 = vadd.f32 %v1188, %v1158
    %v1190 = vadd.f32 %v1189, %v1159
    %v1191 = vadd.f32 %v1190, %v1160
    %v1192 = vadd.f32 %v1191, %v1161
    %v1193 = vadd.f32 %v1192, %v1162
    %v1194 = vadd.f32 %v1193, %v1163
    %v1195 = vadd.f32 %v1194, %v1164
    %v1196 = vadd.f32 %v1195, %v1165
    %v1197 = vadd.f32 %v1196, %v1166
    %v1198 = vadd.f32 %v1197, %v1167
    %v1199 = vadd.f32 %v1198, %v1168
    %v1200 = vadd.f32 %v1199, %v1169
    %v1201 = vadd.f32 %v1200, %v1170
    %v1202 = vadd.f32 %v1201, %v1171
    %v1203 = vadd.f32 %v1202, %v1172
    %v1204 = vadd.f32 %v1203, %v1173
    %v1205 = vadd.f32 %v1204, %v1174
    %v1206 = vadd.f32 %v1205, %v1175
    %v1207 = vadd.f32 %v1206, %v1176
    %v1208 = vadd.f32 %v1207, %v1177
    %v1209 = vadd.f32 %v1208, %v1178
    %v1210 = vadd.f32 %v1209, %v1179
    %1211 = vadd.xlane.f32.xlu0 %v1210
    %v1212 = vpop.xlane.xlu0 %1211
    %v1213 = vrot.slane %v1212, 4
    %v1214 = vadd.f32 %v1212, %v1213
    %v1215 = vrot.slane %v1214, 2
    %v1216 = vadd.f32 %v1214, %v1215
    %v1217 = vrot.slane %v1216, 1
    %v1218 = vadd.f32 %v1216, %v1217
    %s1219 = vtos %v1218
    %v1220 = vstv %s1219
    %v1221 = vadd.f32 %v1147, %v1220
    %1222 = vst.msk [vmem:[#allocation4] sm:$0x1] %vm1145, %v1221
    %v1223 = vld [vmem:[#allocation5] sm:$0x1]
    %v1224 = vsel %vm1038, 1, 0
    %v1225 = vsel %vm1039, 1, 0
    %v1226 = vsel %vm1040, 1, 0
    %v1227 = vsel %vm1041, 1, 0
    %v1228 = vsel %vm1042, 1, 0
    %v1229 = vsel %vm1043, 1, 0
    %v1230 = vsel %vm1044, 1, 0
    %v1231 = vsel %vm1045, 1, 0
    %v1232 = vsel %vm1046, 1, 0
    %v1233 = vsel %vm1047, 1, 0
    %v1234 = vsel %vm1048, 1, 0
    %v1235 = vsel %vm1049, 1, 0
    %v1236 = vsel %vm1050, 1, 0
    %v1237 = vsel %vm1051, 1, 0
    %v1238 = vsel %vm1052, 1, 0
    %v1239 = vsel %vm1053, 1, 0
    %v1240 = vsel %vm1054, 1, 0
    %v1241 = vsel %vm1055, 1, 0
    %v1242 = vsel %vm1056, 1, 0
    %v1243 = vsel %vm1057, 1, 0
    %v1244 = vsel %vm1058, 1, 0
    %v1245 = vsel %vm1059, 1, 0
    %v1246 = vsel %vm1060, 1, 0
    %v1247 = vsel %vm1061, 1, 0
    %v1248 = vsel %vm1062, 1, 0
    %v1249 = vsel %vm1063, 1, 0
    %v1250 = vsel %vm1064, 1, 0
    %v1251 = vsel %vm1065, 1, 0
    %v1252 = vsel %vm1066, 1, 0
    %v1253 = vsel %vm1067, 1, 0
    %v1254 = vsel %vm1068, 1, 0
    %v1255 = vsel %vm1069, 1, 0
    %v1256 = vcvt.s32.f32 %v1224
    %v1257 = vcvt.s32.f32 %v1225
    %v1258 = vcvt.s32.f32 %v1226
    %v1259 = vcvt.s32.f32 %v1227
    %v1260 = vcvt.s32.f32 %v1228
    %v1261 = vcvt.s32.f32 %v1229
    %v1262 = vcvt.s32.f32 %v1230
    %v1263 = vcvt.s32.f32 %v1231
    %v1264 = vcvt.s32.f32 %v1232
    %v1265 = vcvt.s32.f32 %v1233
    %v1266 = vcvt.s32.f32 %v1234
    %v1267 = vcvt.s32.f32 %v1235
    %v1268 = vcvt.s32.f32 %v1236
    %v1269 = vcvt.s32.f32 %v1237
    %v1270 = vcvt.s32.f32 %v1238
    %v1271 = vcvt.s32.f32 %v1239
    %v1272 = vcvt.s32.f32 %v1240
    %v1273 = vcvt.s32.f32 %v1241
    %v1274 = vcvt.s32.f32 %v1242
    %v1275 = vcvt.s32.f32 %v1243
    %v1276 = vcvt.s32.f32 %v1244
    %v1277 = vcvt.s32.f32 %v1245
    %v1278 = vcvt.s32.f32 %v1246
    %v1279 = vcvt.s32.f32 %v1247
    %v1280 = vcvt.s32.f32 %v1248
    %v1281 = vcvt.s32.f32 %v1249
    %v1282 = vcvt.s32.f32 %v1250
    %v1283 = vcvt.s32.f32 %v1251
    %v1284 = vcvt.s32.f32 %v1252
    %v1285 = vcvt.s32.f32 %v1253
    %v1286 = vcvt.s32.f32 %v1254
    %v1287 = vcvt.s32.f32 %v1255
    %v1288 = vadd.f32 %v1256, %v1257
    %v1289 = vadd.f32 %v1288, %v1258
    %v1290 = vadd.f32 %v1289, %v1259
    %v1291 = vadd.f32 %v1290, %v1260
    %v1292 = vadd.f32 %v1291, %v1261
    %v1293 = vadd.f32 %v1292, %v1262
    %v1294 = vadd.f32 %v1293, %v1263
    %v1295 = vadd.f32 %v1294, %v1264
    %v1296 = vadd.f32 %v1295, %v1265
    %v1297 = vadd.f32 %v1296, %v1266
    %v1298 = vadd.f32 %v1297, %v1267
    %v1299 = vadd.f32 %v1298, %v1268
    %v1300 = vadd.f32 %v1299, %v1269
    %v1301 = vadd.f32 %v1300, %v1270
    %v1302 = vadd.f32 %v1301, %v1271
    %v1303 = vadd.f32 %v1302, %v1272
    %v1304 = vadd.f32 %v1303, %v1273
    %v1305 = vadd.f32 %v1304, %v1274
    %v1306 = vadd.f32 %v1305, %v1275
    %v1307 = vadd.f32 %v1306, %v1276
    %v1308 = vadd.f32 %v1307, %v1277
    %v1309 = vadd.f32 %v1308, %v1278
    %v1310 = vadd.f32 %v1309, %v1279
    %v1311 = vadd.f32 %v1310, %v1280
    %v1312 = vadd.f32 %v1311, %v1281
    %v1313 = vadd.f32 %v1312, %v1282
    %v1314 = vadd.f32 %v1313, %v1283
    %v1315 = vadd.f32 %v1314, %v1284
    %v1316 = vadd.f32 %v1315, %v1285
    %v1317 = vadd.f32 %v1316, %v1286
    %v1318 = vadd.f32 %v1317, %v1287
    %1319 = vadd.xlane.f32.xlu0 %v1318
    %v1320 = vpop.xlane.xlu0 %1319
    %v1321 = vrot.slane %v1320, 4
    %v1322 = vadd.f32 %v1320, %v1321
    %v1323 = vrot.slane %v1322, 2
    %v1324 = vadd.f32 %v1322, %v1323
    %v1325 = vrot.slane %v1324, 1
    %v1326 = vadd.f32 %v1324, %v1325
    %s1327 = vtos %v1326
    %v1328 = vstv %s1327
    %v1329 = vadd.f32 %v1223, %v1328
    %1330 = vst.msk [vmem:[#allocation5] sm:$0x1] %vm1145, %v1329
    %v1331 = vld [vmem:[#allocation2] sm:$0x1]
    %v1332 = vadd.f32 %v147, %v149
    %v1333 = vadd.f32 %v1332, %v151
    %v1334 = vadd.f32 %v1333, %v153
    %v1335 = vadd.f32 %v1334, %v155
    %v1336 = vadd.f32 %v1335, %v157
    %v1337 = vadd.f32 %v1336, %v159
    %v1338 = vadd.f32 %v1337, %v161
    %v1339 = vadd.f32 %v1338, %v163
    %v1340 = vadd.f32 %v1339, %v165
    %v1341 = vadd.f32 %v1340, %v167
    %v1342 = vadd.f32 %v1341, %v169
    %v1343 = vadd.f32 %v1342, %v171
    %v1344 = vadd.f32 %v1343, %v173
    %v1345 = vadd.f32 %v1344, %v175
    %v1346 = vadd.f32 %v1345, %v177
    %v1347 = vadd.f32 %v1346, %v179
    %v1348 = vadd.f32 %v1347, %v181
    %v1349 = vadd.f32 %v1348, %v183
    %v1350 = vadd.f32 %v1349, %v185
    %v1351 = vadd.f32 %v1350, %v187
    %v1352 = vadd.f32 %v1351, %v189
    %v1353 = vadd.f32 %v1352, %v191
    %v1354 = vadd.f32 %v1353, %v193
    %v1355 = vadd.f32 %v1354, %v195
    %v1356 = vadd.f32 %v1355, %v197
    %v1357 = vadd.f32 %v1356, %v199
    %v1358 = vadd.f32 %v1357, %v201
    %v1359 = vadd.f32 %v1358, %v203
    %v1360 = vadd.f32 %v1359, %v205
    %v1361 = vadd.f32 %v1360, %v207
    %v1362 = vadd.f32 %v1361, %v209
    %1363 = vadd.xlane.f32.xlu0 %v1362
    %v1364 = vpop.xlane.xlu0 %1363
    %v1365 = vrot.slane %v1364, 4
    %v1366 = vadd.f32 %v1364, %v1365
    %v1367 = vrot.slane %v1366, 2
    %v1368 = vadd.f32 %v1366, %v1367
    %v1369 = vrot.slane %v1368, 1
    %v1370 = vadd.f32 %v1368, %v1369
    %s1371 = vtos %v1370
    %v1372 = vstv %s1371
    %v1373 = vadd.f32 %v1331, %v1372
    %1374 = vst.msk [vmem:[#allocation2] sm:$0x1] %vm1145, %v1373
    // Predicated region
    $region38: #{tpu_custom_call.1} parent=1 // pred_check
      %p1375 = pneg %p73
    $region39: #{tpu_custom_call.1} parent=1 // pred_check_branch
      %1377 = sbr.rel (%p1375) target = $region41
    $region40: #{tpu_custom_call.1} parent=1 // pred_region
      %v1378 = vld [vmem:[#allocation4] sm:$0x1]
      %v1379 = vld [vmem:[#allocation3] sm:$0x1]
      %v1380 = vsub.f32 %v1378, %v1379
      %v1381 = vld [vmem:[#allocation5] sm:$0x1]
      %v1382 = vrcp.pop %v1381
      %v1383 = vmul.f32 %v1380, %v1382
      %1384 = vst.msk [vmem:[#allocation14] sm:$0x1] %vm1145, %v1383
    $region41: #{tpu_custom_call.1} parent=1 // pred_fallthru
      _
    // Predicated region
    $region42: #{tpu_custom_call.1} parent=1 // pred_check
      _
    $region43: #{tpu_custom_call.1} parent=1 // pred_check_branch
      %1386 = sbr.rel (0) target = $region45
    $region44: #{tpu_custom_call.1} parent=1 // pred_region
      %s1388 = ssub.s32 16, 16
      %1389 = vsyncadd [#allocation8], %s1388
      %s1391 = sshll.u32 [#allocation14], 4
      %s1392 = int_to_ptr.vmem [resolvable:$true] %s1391
      %1394 = dma.vmem_to_hbm [thread:$0]  %s1392, 16, %s4, [#allocation8]
    $region45: #{tpu_custom_call.1} parent=1 // pred_fallthru
      _
    // Predicated region
    $region46: #{tpu_custom_call.1} parent=1 // pred_check
      _
    $region47: #{tpu_custom_call.1} parent=1 // pred_check_branch
      %1396 = sbr.rel (0) target = $region49
    $region48: #{tpu_custom_call.1} parent=1 // pred_region
      %1397 = dma.done [#allocation8], 16
    $region49: #{tpu_custom_call.1} parent=1 // pred_fallthru
      _
    %1398 = vsyncpa [#allocation7], 1
    %1399 = vsyncpa [#allocation10], 1
    %1400 = vsyncpa [#allocation13], 1
    %1401 = vsyncpa [#allocation8], 1

</llo_original>
